<compile_context>
chip_gen: v6e
topology: v6e:2x2x1
jax: 0.10.0
libtpu: 0.0.40
codegen_flags: <defaults>
</compile_context>

<pallas_src>
import functools

import jax
import jax.numpy as jnp
from jax.experimental import pallas as pl
from jax.experimental.pallas import tpu as pltpu


# ----------------------------------------------------------------------------
# Pallas kernels
# ----------------------------------------------------------------------------
def _conv_silu_kernel(x_ref, w_ref, b_ref, o_ref):
    """One M-tile of a fused im2col conv:  O = SiLU(X @ W + b)."""
    z = jnp.dot(x_ref[...], w_ref[...], preferred_element_type=jnp.float32)
    z = z + b_ref[...]
    z = z * jax.nn.sigmoid(z)                       # SiLU
    o_ref[...] = z.astype(o_ref.dtype)


def conv_silu(x, w, b, *, tile_m):
    """x: (Mp, K) bf16, w: (K, N) bf16, b: (1, N) f32 -> (Mp, N) bf16.

    Mp must be a multiple of tile_m; the M axis is a parallel grid axis so the
    pipeline double-buffers tiles and the grid can be sharded across cores.
    """
    Mp, K = x.shape
    _, N = w.shape
    return pl.pallas_call(
        _conv_silu_kernel,
        out_shape=jax.ShapeDtypeStruct((Mp, N), jnp.bfloat16),
        grid=(Mp // tile_m,),
        in_specs=[
            pl.BlockSpec((tile_m, K), lambda i: (i, 0)),
            pl.BlockSpec((K, N), lambda i: (0, 0)),
            pl.BlockSpec((1, N), lambda i: (0, 0)),
        ],
        out_specs=pl.BlockSpec((tile_m, N), lambda i: (i, 0)),
        compiler_params=pltpu.CompilerParams(dimension_semantics=("parallel",)),
    )(x, w, b)


def _conv_head_decode_kernel(p_ref, w2_ref, b2_ref, w3_ref, b3_ref, o_ref, *,
                             nx, ny, stride, anchors, m_real):
    """Fused conv2 + 1x1 detect head + YOLOv5 decode for one M-tile.

    Output slab layout (lane-dense, 128 wide):
      lanes [8a .. 8a+3] = xyxy box of anchor a, lane 8a+4 = obj*cls0 score,
      remaining lanes 0.  Padded rows get score = -1.
    """
    tile_m = p_ref.shape[0]
    na = len(anchors)

    # conv2 (3x3 s2, via im2col) + SiLU; stays in vregs, never written to HBM.
    z = jnp.dot(p_ref[...], w2_ref[...], preferred_element_type=jnp.float32)
    z = z + b2_ref[...]
    z = z * jax.nn.sigmoid(z)

    # detect head: 1x1 conv producing only na*(5+1) channels (classes=[0]).
    h = jnp.dot(z.astype(jnp.bfloat16), w3_ref[...],
                preferred_element_type=jnp.float32) + b3_ref[...]
    y = jax.nn.sigmoid(h)                           # sigmoid only on used channels

    # Grid coordinates generated in-kernel from the flat (b, yi, xi) row index.
    row = (jax.lax.broadcasted_iota(jnp.int32, (tile_m, 1), 0)
           + pl.program_id(0) * tile_m)
    row_f = row.astype(jnp.float32)
    q = jnp.floor(row_f / nx)
    gx = row_f - nx * q                             # row %  nx
    gy = q - ny * jnp.floor(q / ny)                 # (row // nx) % ny
    valid = row < m_real

    groups = []
    for a in range(na):
        g = y[:, 6 * a:6 * (a + 1)]
        cx = (g[:, 0:1] * 2.0 - 0.5 + gx) * stride
        cy = (g[:, 1:2] * 2.0 - 0.5 + gy) * stride
        bw = (g[:, 2:3] * 2.0) ** 2 * anchors[a][0]
        bh = (g[:, 3:4] * 2.0) ** 2 * anchors[a][1]
        score = jnp.where(valid, g[:, 4:5] * g[:, 5:6], -1.0)
        groups.append(jnp.concatenate(
            [cx - 0.5 * bw, cy - 0.5 * bh, cx + 0.5 * bw, cy + 0.5 * bh,
             score, jnp.zeros((tile_m, 3), jnp.float32)], axis=-1))
    pad = jnp.zeros((tile_m, 128 - 8 * na), jnp.float32)
    o_ref[...] = jnp.concatenate(groups + [pad], axis=-1)  # single lane-dense store


def conv_head_decode(p2, w2, b2, w3, b3, *, tile_m, nx, ny, stride, anchors,
                     m_real):
    Mp, K = p2.shape
    kern = functools.partial(
        _conv_head_decode_kernel, nx=float(nx), ny=float(ny),
        stride=float(stride), anchors=tuple(anchors), m_real=int(m_real))
    return pl.pallas_call(
        kern,
        out_shape=jax.ShapeDtypeStruct((Mp, 128), jnp.float32),
        grid=(Mp // tile_m,),
        in_specs=[
            pl.BlockSpec((tile_m, K), lambda i: (i, 0)),
            pl.BlockSpec((K, w2.shape[1]), lambda i: (0, 0)),
            pl.BlockSpec((1, b2.shape[1]), lambda i: (0, 0)),
            pl.BlockSpec((w3.shape[0], w3.shape[1]), lambda i: (0, 0)),
            pl.BlockSpec((1, b3.shape[1]), lambda i: (0, 0)),
        ],
        out_specs=pl.BlockSpec((tile_m, 128), lambda i: (i, 0)),
        compiler_params=pltpu.CompilerParams(dimension_semantics=("parallel",)),
    )(p2, w2, b2, w3, b3)


# ----------------------------------------------------------------------------
# Plain-JAX glue: im2col, padding helpers
# ----------------------------------------------------------------------------
def im2col(x_nhwc, kh, kw, stride, pad, k_pad_to=None):
    """im2col with the K-padding folded into the concatenate (no extra pad pass)."""
    B, H, W, C = x_nhwc.shape
    xp = jnp.pad(x_nhwc, ((0, 0), (pad, pad), (pad, pad), (0, 0)))
    Ho = (H + 2 * pad - kh) // stride + 1
    Wo = (W + 2 * pad - kw) // stride + 1
    cols = []
    for i in range(kh):
        for j in range(kw):
            cols.append(xp[:, i:i + Ho * stride:stride, j:j + Wo * stride:stride, :])
    k = kh * kw * C
    if k_pad_to is not None and k_pad_to > k:
        cols.append(jnp.zeros((B, Ho, Wo, k_pad_to - k), x_nhwc.dtype))
        k = k_pad_to
    patches = jnp.concatenate(cols, axis=-1)        # (B, Ho, Wo, k)
    return patches.reshape(B * Ho * Wo, k), Ho, Wo


def _round_up(v, m):
    return ((v + m - 1) // m) * m


def _pad_rows(x, rows):
    if rows == x.shape[0]:
        return x
    return jnp.pad(x, ((0, rows - x.shape[0]), (0, 0)))


# ----------------------------------------------------------------------------
# Model
# ----------------------------------------------------------------------------
class YoloV5PallasModel:
    """Synthetic YOLOv5-style model; mirrors YoloV5CustomModel.forward semantics."""

    NC = 80                                   # COCO classes (only class 0 kept)
    NA = 3                                    # anchors per scale
    ANCHORS = ((10.0, 13.0), (16.0, 30.0), (33.0, 23.0))
    MAX_TILE_M = 1024                         # ~1 MiB/tile f32 slab: VMEM-safe on v7x

    def __init__(self, confidence=0.6, iou_threshold=0.45, classes=(0,),
                 multi_label=False, number_detections_per_image=1, seed=0):
        self.conf = confidence
        self.iou = iou_threshold              # unused: max_det=1 -> NMS degenerates
        self.classes = tuple(classes)
        self.multi_label = multi_label
        self.max_det = number_detections_per_image
        # TODO(synk): torch.hub pretrained yolov5n weight loading has no Pallas
        # equivalent; deterministic synthetic weights are used instead.
        key = jax.random.PRNGKey(seed)
        k1, k2, k3, k4, k5, k6 = jax.random.split(key, 6)
        c1, c2 = 16, 32
        head_c = self.NA * 6                  # only (x,y,w,h,obj,cls0) per anchor
        self.w1 = (0.1 * jax.random.normal(k1, (32, c1), jnp.float32)).astype(jnp.bfloat16)
        self.b1 = 0.1 * jax.random.normal(k2, (1, c1), jnp.float32)
        self.w2 = (0.1 * jax.random.normal(k3, (9 * c1, c2), jnp.float32)).astype(jnp.bfloat16)
        self.b2 = 0.1 * jax.random.normal(k4, (1, c2), jnp.float32)
        self.w3 = (0.1 * jax.random.normal(k5, (c2, head_c), jnp.float32)).astype(jnp.bfloat16)
        self.b3 = 0.1 * jax.random.normal(k6, (1, head_c), jnp.float32)
        self._detect_jit = jax.jit(self._detect)

    def _detect(self, image_nchw):
        B, C, H, W = image_nchw.shape
        x = jnp.transpose(image_nchw, (0, 2, 3, 1)).astype(jnp.bfloat16)   # NHWC bf16

        # --- conv1: 3x3 s2 + SiLU (Pallas, M-tiled, parallel grid) ----------
        p1, h1, w1 = im2col(x, 3, 3, 2, 1, k_pad_to=32)      # K: 27 -> 32
        m1 = p1.shape[0]
        tm1 = min(self.MAX_TILE_M, _round_up(m1, 8))
        p1 = _pad_rows(p1, _round_up(m1, tm1))
        y1 = conv_silu(p1, self.w1, self.b1, tile_m=tm1)[:m1]
        y1 = y1.reshape(B, h1, w1, -1)

        # --- conv2 + detect head + decode fused in one Pallas kernel --------
        # TODO(synk): im2col still materializes 9x patches in XLA; a halo-block
        # Pallas conv would remove this pass at large resolutions.
        p2, h2, w2 = im2col(y1, 3, 3, 2, 1)                   # K = 9*16 = 144
        m2 = p2.shape[0]
        tm2 = min(self.MAX_TILE_M, _round_up(m2, 8))
        p2 = _pad_rows(p2, _round_up(m2, tm2))
        stride = H / h2
        slab = conv_head_decode(p2, self.w2, self.b2, self.w3, self.b3,
                                tile_m=tm2, nx=w2, ny=h2, stride=stride,
                                anchors=self.ANCHORS, m_real=m2)

        # --- on-device reduction: best person box of image 0 ----------------
        slab0 = slab[:h2 * w2]                                # results.xyxy[0]
        scores = jnp.stack([slab0[:, 4], slab0[:, 12], slab0[:, 20]],
                           axis=-1).reshape(-1)
        boxes = jnp.stack([slab0[:, 0:4], slab0[:, 8:12], slab0[:, 16:20]],
                          axis=1).reshape(-1, 4)
        best = jnp.argmax(scores)
        return boxes[best], scores[best]                      # 4 + 1 floats only

    def __call__(self, image_nchw):
        best_box, best_score = self._detect_jit(jnp.asarray(image_nchw, jnp.float32))
        jax.block_until_ready((best_box, best_score))
        # TODO(synk): IoU-based NMS is skipped; with max_det=1 and classes=[0]
        # it reduces to the on-device argmax above.
        if float(best_score) > self.conf:
            xmin, ymin, xmax, ymax = [round(float(v)) for v in best_box]
            x_center = round(xmin + (xmax - xmin) / 2)
            y_center = round(ymin + (ymax - ymin) / 2)
            return (x_center, y_center)
        return None


if __name__ == "__main__":
    key = jax.random.PRNGKey(0)
    image = jax.random.uniform(key, (1, 3, 32, 32), dtype=jnp.float32)  # NCHW [0,1)

    model = YoloV5PallasModel(confidence=0.6, iou_threshold=0.45, classes=[0],
                              multi_label=False, number_detections_per_image=1)
    result = model(image)     # (x_center, y_center) or None, like the module
    _ = result                # device work already blocked on inside __call__
    print("KERNEL_OK")
</pallas_src>

<mosaic_0001>
module attributes {stable_mosaic.version = 11 : i64} {
  func.func @_conv_silu_kernel(%arg0: i32, %arg1: memref<256x32xbf16, #tpu.memory_space<vmem>>, %arg2: memref<32x16xbf16, #tpu.memory_space<vmem>>, %arg3: memref<1x16xf32, #tpu.memory_space<vmem>>, %arg4: memref<256x16xbf16, #tpu.memory_space<vmem>>) attributes {dimension_semantics = [#tpu.dimension_semantics<parallel>], iteration_bounds = array<i64: 1>, scalar_prefetch = 0 : i64, scratch_operands = 0 : i64, tpu.core_type = #tpu.core_type<tc>, window_params = [{transform_indices = @transform_0, window_bounds = array<i64: 256, 32>}, {pipeline_mode = #tpu.pipeline_mode<synchronous>, transform_indices = @transform_1, window_bounds = array<i64: 32, 16>}, {pipeline_mode = #tpu.pipeline_mode<synchronous>, transform_indices = @transform_2, window_bounds = array<i64: 1, 16>}, {transform_indices = @transform_3, window_bounds = array<i64: 256, 16>}]} {
    %c0 = arith.constant 0 : index
    %c0_0 = arith.constant 0 : index
    %0 = vector.load %arg1[%c0, %c0_0] : memref<256x32xbf16, #tpu.memory_space<vmem>>, vector<256x32xbf16>
    %c0_1 = arith.constant 0 : index
    %c0_2 = arith.constant 0 : index
    %1 = vector.load %arg2[%c0_1, %c0_2] : memref<32x16xbf16, #tpu.memory_space<vmem>>, vector<32x16xbf16>
    %cst = arith.constant dense<0.000000e+00> : vector<256x16xf32>
    %2 = tpu.matmul %0, %1, %cst {dimension_numbers = #tpu.dot_dimension_numbers<[1], [0], [0], [1], [0, 0, 1, 1], [], []>} : vector<256x32xbf16>, vector<32x16xbf16>, vector<256x16xf32> -> vector<256x16xf32>
    %c0_3 = arith.constant 0 : index
    %c0_4 = arith.constant 0 : index
    %3 = vector.load %arg3[%c0_3, %c0_4] : memref<1x16xf32, #tpu.memory_space<vmem>>, vector<1x16xf32>
    %4 = vector.broadcast %3 : vector<1x16xf32> to vector<256x16xf32>
    %5 = arith.addf %2, %4 : vector<256x16xf32>
    %6 = arith.negf %5 : vector<256x16xf32>
    %7 = math.exp %6 : vector<256x16xf32>
    %cst_5 = arith.constant 1.000000e+00 : f32
    %8 = vector.broadcast %cst_5 : f32 to vector<256x16xf32>
    %9 = arith.addf %8, %7 : vector<256x16xf32>
    %10 = arith.divf %8, %9 : vector<256x16xf32>
    %11 = arith.mulf %5, %10 : vector<256x16xf32>
    %12 = arith.truncf %11 : vector<256x16xf32> to vector<256x16xbf16>
    %c0_6 = arith.constant 0 : index
    %c0_7 = arith.constant 0 : index
    %13 = vector.load %arg4[%c0_6, %c0_7] : memref<256x16xbf16, #tpu.memory_space<vmem>>, vector<256x16xbf16>
    tpu.vector_store %arg4[%c0_6, %c0_7], %12 {strides = array<i32>} : memref<256x16xbf16, #tpu.memory_space<vmem>>, vector<256x16xbf16>,
    return
  }
  func.func @transform_0(%arg0: i32) -> (i32, i32) {
    %c0_i32 = arith.constant 0 : i32
    %c0_i32_0 = arith.constant 0 : i32
    return %arg0, %c0_i32 : i32, i32
  }
  func.func @transform_1(%arg0: i32) -> (i32, i32) {
    %c0_i32 = arith.constant 0 : i32
    %c0_i32_0 = arith.constant 0 : i32
    %c0_i32_1 = arith.constant 0 : i32
    return %c0_i32, %c0_i32_0 : i32, i32
  }
  func.func @transform_2(%arg0: i32) -> (i32, i32) {
    %c0_i32 = arith.constant 0 : i32
    %c0_i32_0 = arith.constant 0 : i32
    %c0_i32_1 = arith.constant 0 : i32
    return %c0_i32, %c0_i32_0 : i32, i32
  }
  func.func @transform_3(%arg0: i32) -> (i32, i32) {
    %c0_i32 = arith.constant 0 : i32
    %c0_i32_0 = arith.constant 0 : i32
    return %arg0, %c0_i32 : i32, i32
  }
}

module attributes {stable_mosaic.version = 11 : i64} {
  func.func @_conv_head_decode_kernel(%arg0: i32, %arg1: memref<64x144xbf16, #tpu.memory_space<vmem>>, %arg2: memref<144x32xbf16, #tpu.memory_space<vmem>>, %arg3: memref<1x32xf32, #tpu.memory_space<vmem>>, %arg4: memref<32x18xbf16, #tpu.memory_space<vmem>>, %arg5: memref<1x18xf32, #tpu.memory_space<vmem>>, %arg6: memref<64x128xf32, #tpu.memory_space<vmem>>) attributes {dimension_semantics = [#tpu.dimension_semantics<parallel>], iteration_bounds = array<i64: 1>, scalar_prefetch = 0 : i64, scratch_operands = 0 : i64, tpu.core_type = #tpu.core_type<tc>, window_params = [{transform_indices = @transform_0, window_bounds = array<i64: 64, 144>}, {pipeline_mode = #tpu.pipeline_mode<synchronous>, transform_indices = @transform_1, window_bounds = array<i64: 144, 32>}, {pipeline_mode = #tpu.pipeline_mode<synchronous>, transform_indices = @transform_2, window_bounds = array<i64: 1, 32>}, {pipeline_mode = #tpu.pipeline_mode<synchronous>, transform_indices = @transform_3, window_bounds = array<i64: 32, 18>}, {pipeline_mode = #tpu.pipeline_mode<synchronous>, transform_indices = @transform_4, window_bounds = array<i64: 1, 18>}, {transform_indices = @transform_5, window_bounds = array<i64: 64, 128>}]} {
    %c0 = arith.constant 0 : index
    %c0_0 = arith.constant 0 : index
    %0 = vector.load %arg1[%c0, %c0_0] : memref<64x144xbf16, #tpu.memory_space<vmem>>, vector<64x144xbf16>
    %c0_1 = arith.constant 0 : index
    %c0_2 = arith.constant 0 : index
    %1 = vector.load %arg2[%c0_1, %c0_2] : memref<144x32xbf16, #tpu.memory_space<vmem>>, vector<144x32xbf16>
    %cst = arith.constant dense<0.000000e+00> : vector<64x32xf32>
    %2 = tpu.matmul %0, %1, %cst {dimension_numbers = #tpu.dot_dimension_numbers<[1], [0], [0], [1], [0, 0, 1, 1], [], []>} : vector<64x144xbf16>, vector<144x32xbf16>, vector<64x32xf32> -> vector<64x32xf32>
    %c0_3 = arith.constant 0 : index
    %c0_4 = arith.constant 0 : index
    %3 = vector.load %arg3[%c0_3, %c0_4] : memref<1x32xf32, #tpu.memory_space<vmem>>, vector<1x32xf32>
    %4 = vector.broadcast %3 : vector<1x32xf32> to vector<64x32xf32>
    %5 = arith.addf %2, %4 : vector<64x32xf32>
    %6 = arith.negf %5 : vector<64x32xf32>
    %7 = math.exp %6 : vector<64x32xf32>
    %cst_5 = arith.constant 1.000000e+00 : f32
    %8 = vector.broadcast %cst_5 : f32 to vector<64x32xf32>
    %9 = arith.addf %8, %7 : vector<64x32xf32>
    %10 = arith.divf %8, %9 : vector<64x32xf32>
    %11 = arith.mulf %5, %10 : vector<64x32xf32>
    %12 = arith.truncf %11 : vector<64x32xf32> to vector<64x32xbf16>
    %c0_6 = arith.constant 0 : index
    %c0_7 = arith.constant 0 : index
    %13 = vector.load %arg4[%c0_6, %c0_7] : memref<32x18xbf16, #tpu.memory_space<vmem>>, vector<32x18xbf16>
    %cst_8 = arith.constant dense<0.000000e+00> : vector<64x18xf32>
    %14 = tpu.matmul %12, %13, %cst_8 {dimension_numbers = #tpu.dot_dimension_numbers<[1], [0], [0], [1], [0, 0, 1, 1], [], []>} : vector<64x32xbf16>, vector<32x18xbf16>, vector<64x18xf32> -> vector<64x18xf32>
    %c0_9 = arith.constant 0 : index
    %c0_10 = arith.constant 0 : index
    %15 = vector.load %arg5[%c0_9, %c0_10] : memref<1x18xf32, #tpu.memory_space<vmem>>, vector<1x18xf32>
    %16 = vector.broadcast %15 : vector<1x18xf32> to vector<64x18xf32>
    %17 = arith.addf %14, %16 : vector<64x18xf32>
    %18 = arith.negf %17 : vector<64x18xf32>
    %19 = math.exp %18 : vector<64x18xf32>
    %cst_11 = arith.constant 1.000000e+00 : f32
    %20 = vector.broadcast %cst_11 : f32 to vector<64x18xf32>
    %21 = arith.addf %20, %19 : vector<64x18xf32>
    %22 = arith.divf %20, %21 : vector<64x18xf32>
    %23 = tpu.iota {dimensions = array<i32: 0>} : vector<64x1xi32>
    %c64_i32 = arith.constant 64 : i32
    %24 = arith.muli %arg0, %c64_i32 : i32
    %25 = vector.broadcast %24 : i32 to vector<64x1xi32>
    %26 = arith.addi %23, %25 : vector<64x1xi32>
    %27 = arith.sitofp %26 : vector<64x1xi32> to vector<64x1xf32>
    %cst_12 = arith.constant 8.000000e+00 : f32
    %28 = vector.broadcast %cst_12 : f32 to vector<64x1xf32>
    %29 = arith.divf %27, %28 : vector<64x1xf32>
    %30 = math.floor %29 : vector<64x1xf32>
    %cst_13 = arith.constant 8.000000e+00 : f32
    %31 = vector.broadcast %cst_13 : f32 to vector<64x1xf32>
    %32 = arith.mulf %31, %30 : vector<64x1xf32>
    %33 = arith.subf %27, %32 : vector<64x1xf32>
    %cst_14 = arith.constant 8.000000e+00 : f32
    %34 = vector.broadcast %cst_14 : f32 to vector<64x1xf32>
    %35 = arith.divf %30, %34 : vector<64x1xf32>
    %36 = math.floor %35 : vector<64x1xf32>
    %cst_15 = arith.constant 8.000000e+00 : f32
    %37 = vector.broadcast %cst_15 : f32 to vector<64x1xf32>
    %38 = arith.mulf %37, %36 : vector<64x1xf32>
    %39 = arith.subf %30, %38 : vector<64x1xf32>
    %c64_i32_16 = arith.constant 64 : i32
    %40 = vector.broadcast %c64_i32_16 : i32 to vector<64x1xi32>
    %41 = arith.cmpi slt, %26, %40 : vector<64x1xi32>
    %42 = vector.extract_strided_slice %22 {offsets = [0, 0], sizes = [64, 6], strides = [1, 1]} : vector<64x18xf32> to vector<64x6xf32>
    %43 = vector.extract_strided_slice %42 {offsets = [0, 0], sizes = [64, 1], strides = [1, 1]} : vector<64x6xf32> to vector<64x1xf32>
    %cst_17 = arith.constant 2.000000e+00 : f32
    %44 = vector.broadcast %cst_17 : f32 to vector<64x1xf32>
    %45 = arith.mulf %43, %44 : vector<64x1xf32>
    %cst_18 = arith.constant 5.000000e-01 : f32
    %46 = vector.broadcast %cst_18 : f32 to vector<64x1xf32>
    %47 = arith.subf %45, %46 : vector<64x1xf32>
    %48 = arith.addf %47, %33 : vector<64x1xf32>
    %cst_19 = arith.constant 4.000000e+00 : f32
    %49 = vector.broadcast %cst_19 : f32 to vector<64x1xf32>
    %50 = arith.mulf %48, %49 : vector<64x1xf32>
    %51 = vector.extract_strided_slice %42 {offsets = [0, 1], sizes = [64, 1], strides = [1, 1]} : vector<64x6xf32> to vector<64x1xf32>
    %cst_20 = arith.constant 2.000000e+00 : f32
    %52 = vector.broadcast %cst_20 : f32 to vector<64x1xf32>
    %53 = arith.mulf %51, %52 : vector<64x1xf32>
    %cst_21 = arith.constant 5.000000e-01 : f32
    %54 = vector.broadcast %cst_21 : f32 to vector<64x1xf32>
    %55 = arith.subf %53, %54 : vector<64x1xf32>
    %56 = arith.addf %55, %39 : vector<64x1xf32>
    %cst_22 = arith.constant 4.000000e+00 : f32
    %57 = vector.broadcast %cst_22 : f32 to vector<64x1xf32>
    %58 = arith.mulf %56, %57 : vector<64x1xf32>
    %59 = vector.extract_strided_slice %42 {offsets = [0, 2], sizes = [64, 1], strides = [1, 1]} : vector<64x6xf32> to vector<64x1xf32>
    %cst_23 = arith.constant 2.000000e+00 : f32
    %60 = vector.broadcast %cst_23 : f32 to vector<64x1xf32>
    %61 = arith.mulf %59, %60 : vector<64x1xf32>
    %62 = arith.mulf %61, %61 : vector<64x1xf32>
    %cst_24 = arith.constant 1.000000e+01 : f32
    %63 = vector.broadcast %cst_24 : f32 to vector<64x1xf32>
    %64 = arith.mulf %62, %63 : vector<64x1xf32>
    %65 = vector.extract_strided_slice %42 {offsets = [0, 3], sizes = [64, 1], strides = [1, 1]} : vector<64x6xf32> to vector<64x1xf32>
    %cst_25 = arith.constant 2.000000e+00 : f32
    %66 = vector.broadcast %cst_25 : f32 to vector<64x1xf32>
    %67 = arith.mulf %65, %66 : vector<64x1xf32>
    %68 = arith.mulf %67, %67 : vector<64x1xf32>
    %cst_26 = arith.constant 1.300000e+01 : f32
    %69 = vector.broadcast %cst_26 : f32 to vector<64x1xf32>
    %70 = arith.mulf %68, %69 : vector<64x1xf32>
    %71 = vector.extract_strided_slice %42 {offsets = [0, 4], sizes = [64, 1], strides = [1, 1]} : vector<64x6xf32> to vector<64x1xf32>
    %72 = vector.extract_strided_slice %42 {offsets = [0, 5], sizes = [64, 1], strides = [1, 1]} : vector<64x6xf32> to vector<64x1xf32>
    %73 = arith.mulf %71, %72 : vector<64x1xf32>
    %cst_27 = arith.constant -1.000000e+00 : f32
    %74 = vector.broadcast %cst_27 : f32 to vector<64x1xf32>
    %75 = arith.select %41, %73, %74 : vector<64x1xi1>, vector<64x1xf32>
    %cst_28 = arith.constant 5.000000e-01 : f32
    %76 = vector.broadcast %cst_28 : f32 to vector<64x1xf32>
    %77 = arith.mulf %76, %64 : vector<64x1xf32>
    %78 = arith.subf %50, %77 : vector<64x1xf32>
    %cst_29 = arith.constant 5.000000e-01 : f32
    %79 = vector.broadcast %cst_29 : f32 to vector<64x1xf32>
    %80 = arith.mulf %79, %70 : vector<64x1xf32>
    %81 = arith.subf %58, %80 : vector<64x1xf32>
    %cst_30 = arith.constant 5.000000e-01 : f32
    %82 = vector.broadcast %cst_30 : f32 to vector<64x1xf32>
    %83 = arith.mulf %82, %64 : vector<64x1xf32>
    %84 = arith.addf %50, %83 : vector<64x1xf32>
    %cst_31 = arith.constant 5.000000e-01 : f32
    %85 = vector.broadcast %cst_31 : f32 to vector<64x1xf32>
    %86 = arith.mulf %85, %70 : vector<64x1xf32>
    %87 = arith.addf %58, %86 : vector<64x1xf32>
    %cst_32 = arith.constant 0.000000e+00 : f32
    %88 = vector.broadcast %cst_32 : f32 to vector<64x3xf32>
    %89 = tpu.concatenate %78, %81, %84, %87, %75, %88 in 1 : vector<64x1xf32>, vector<64x1xf32>, vector<64x1xf32>, vector<64x1xf32>, vector<64x1xf32>, vector<64x3xf32> -> vector<64x8xf32>
    %90 = vector.extract_strided_slice %22 {offsets = [0, 6], sizes = [64, 6], strides = [1, 1]} : vector<64x18xf32> to vector<64x6xf32>
    %91 = vector.extract_strided_slice %90 {offsets = [0, 0], sizes = [64, 1], strides = [1, 1]} : vector<64x6xf32> to vector<64x1xf32>
    %cst_33 = arith.constant 2.000000e+00 : f32
    %92 = vector.broadcast %cst_33 : f32 to vector<64x1xf32>
    %93 = arith.mulf %91, %92 : vector<64x1xf32>
    %cst_34 = arith.constant 5.000000e-01 : f32
    %94 = vector.broadcast %cst_34 : f32 to vector<64x1xf32>
    %95 = arith.subf %93, %94 : vector<64x1xf32>
    %96 = arith.addf %95, %33 : vector<64x1xf32>
    %cst_35 = arith.constant 4.000000e+00 : f32
    %97 = vector.broadcast %cst_35 : f32 to vector<64x1xf32>
    %98 = arith.mulf %96, %97 : vector<64x1xf32>
    %99 = vector.extract_strided_slice %90 {offsets = [0, 1], sizes = [64, 1], strides = [1, 1]} : vector<64x6xf32> to vector<64x1xf32>
    %cst_36 = arith.constant 2.000000e+00 : f32
    %100 = vector.broadcast %cst_36 : f32 to vector<64x1xf32>
    %101 = arith.mulf %99, %100 : vector<64x1xf32>
    %cst_37 = arith.constant 5.000000e-01 : f32
    %102 = vector.broadcast %cst_37 : f32 to vector<64x1xf32>
    %103 = arith.subf %101, %102 : vector<64x1xf32>
    %104 = arith.addf %103, %39 : vector<64x1xf32>
    %cst_38 = arith.constant 4.000000e+00 : f32
    %105 = vector.broadcast %cst_38 : f32 to vector<64x1xf32>
    %106 = arith.mulf %104, %105 : vector<64x1xf32>
    %107 = vector.extract_strided_slice %90 {offsets = [0, 2], sizes = [64, 1], strides = [1, 1]} : vector<64x6xf32> to vector<64x1xf32>
    %cst_39 = arith.constant 2.000000e+00 : f32
    %108 = vector.broadcast %cst_39 : f32 to vector<64x1xf32>
    %109 = arith.mulf %107, %108 : vector<64x1xf32>
    %110 = arith.mulf %109, %109 : vector<64x1xf32>
    %cst_40 = arith.constant 1.600000e+01 : f32
    %111 = vector.broadcast %cst_40 : f32 to vector<64x1xf32>
    %112 = arith.mulf %110, %111 : vector<64x1xf32>
    %113 = vector.extract_strided_slice %90 {offsets = [0, 3], sizes = [64, 1], strides = [1, 1]} : vector<64x6xf32> to vector<64x1xf32>
    %cst_41 = arith.constant 2.000000e+00 : f32
    %114 = vector.broadcast %cst_41 : f32 to vector<64x1xf32>
    %115 = arith.mulf %113, %114 : vector<64x1xf32>
    %116 = arith.mulf %115, %115 : vector<64x1xf32>
    %cst_42 = arith.constant 3.000000e+01 : f32
    %117 = vector.broadcast %cst_42 : f32 to vector<64x1xf32>
    %118 = arith.mulf %116, %117 : vector<64x1xf32>
    %119 = vector.extract_strided_slice %90 {offsets = [0, 4], sizes = [64, 1], strides = [1, 1]} : vector<64x6xf32> to vector<64x1xf32>
    %120 = vector.extract_strided_slice %90 {offsets = [0, 5], sizes = [64, 1], strides = [1, 1]} : vector<64x6xf32> to vector<64x1xf32>
    %121 = arith.mulf %119, %120 : vector<64x1xf32>
    %cst_43 = arith.constant -1.000000e+00 : f32
    %122 = vector.broadcast %cst_43 : f32 to vector<64x1xf32>
    %123 = arith.select %41, %121, %122 : vector<64x1xi1>, vector<64x1xf32>
    %cst_44 = arith.constant 5.000000e-01 : f32
    %124 = vector.broadcast %cst_44 : f32 to vector<64x1xf32>
    %125 = arith.mulf %124, %112 : vector<64x1xf32>
    %126 = arith.subf %98, %125 : vector<64x1xf32>
    %cst_45 = arith.constant 5.000000e-01 : f32
    %127 = vector.broadcast %cst_45 : f32 to vector<64x1xf32>
    %128 = arith.mulf %127, %118 : vector<64x1xf32>
    %129 = arith.subf %106, %128 : vector<64x1xf32>
    %cst_46 = arith.constant 5.000000e-01 : f32
    %130 = vector.broadcast %cst_46 : f32 to vector<64x1xf32>
    %131 = arith.mulf %130, %112 : vector<64x1xf32>
    %132 = arith.addf %98, %131 : vector<64x1xf32>
    %cst_47 = arith.constant 5.000000e-01 : f32
    %133 = vector.broadcast %cst_47 : f32 to vector<64x1xf32>
    %134 = arith.mulf %133, %118 : vector<64x1xf32>
    %135 = arith.addf %106, %134 : vector<64x1xf32>
    %cst_48 = arith.constant 0.000000e+00 : f32
    %136 = vector.broadcast %cst_48 : f32 to vector<64x3xf32>
    %137 = tpu.concatenate %126, %129, %132, %135, %123, %136 in 1 : vector<64x1xf32>, vector<64x1xf32>, vector<64x1xf32>, vector<64x1xf32>, vector<64x1xf32>, vector<64x3xf32> -> vector<64x8xf32>
    %138 = vector.extract_strided_slice %22 {offsets = [0, 12], sizes = [64, 6], strides = [1, 1]} : vector<64x18xf32> to vector<64x6xf32>
    %139 = vector.extract_strided_slice %138 {offsets = [0, 0], sizes = [64, 1], strides = [1, 1]} : vector<64x6xf32> to vector<64x1xf32>
    %cst_49 = arith.constant 2.000000e+00 : f32
    %140 = vector.broadcast %cst_49 : f32 to vector<64x1xf32>
    %141 = arith.mulf %139, %140 : vector<64x1xf32>
    %cst_50 = arith.constant 5.000000e-01 : f32
    %142 = vector.broadcast %cst_50 : f32 to vector<64x1xf32>
    %143 = arith.subf %141, %142 : vector<64x1xf32>
    %144 = arith.addf %143, %33 : vector<64x1xf32>
    %cst_51 = arith.constant 4.000000e+00 : f32
    %145 = vector.broadcast %cst_51 : f32 to vector<64x1xf32>
    %146 = arith.mulf %144, %145 : vector<64x1xf32>
    %147 = vector.extract_strided_slice %138 {offsets = [0, 1], sizes = [64, 1], strides = [1, 1]} : vector<64x6xf32> to vector<64x1xf32>
    %cst_52 = arith.constant 2.000000e+00 : f32
    %148 = vector.broadcast %cst_52 : f32 to vector<64x1xf32>
    %149 = arith.mulf %147, %148 : vector<64x1xf32>
    %cst_53 = arith.constant 5.000000e-01 : f32
    %150 = vector.broadcast %cst_53 : f32 to vector<64x1xf32>
    %151 = arith.subf %149, %150 : vector<64x1xf32>
    %152 = arith.addf %151, %39 : vector<64x1xf32>
    %cst_54 = arith.constant 4.000000e+00 : f32
    %153 = vector.broadcast %cst_54 : f32 to vector<64x1xf32>
    %154 = arith.mulf %152, %153 : vector<64x1xf32>
    %155 = vector.extract_strided_slice %138 {offsets = [0, 2], sizes = [64, 1], strides = [1, 1]} : vector<64x6xf32> to vector<64x1xf32>
    %cst_55 = arith.constant 2.000000e+00 : f32
    %156 = vector.broadcast %cst_55 : f32 to vector<64x1xf32>
    %157 = arith.mulf %155, %156 : vector<64x1xf32>
    %158 = arith.mulf %157, %157 : vector<64x1xf32>
    %cst_56 = arith.constant 3.300000e+01 : f32
    %159 = vector.broadcast %cst_56 : f32 to vector<64x1xf32>
    %160 = arith.mulf %158, %159 : vector<64x1xf32>
    %161 = vector.extract_strided_slice %138 {offsets = [0, 3], sizes = [64, 1], strides = [1, 1]} : vector<64x6xf32> to vector<64x1xf32>
    %cst_57 = arith.constant 2.000000e+00 : f32
    %162 = vector.broadcast %cst_57 : f32 to vector<64x1xf32>
    %163 = arith.mulf %161, %162 : vector<64x1xf32>
    %164 = arith.mulf %163, %163 : vector<64x1xf32>
    %cst_58 = arith.constant 2.300000e+01 : f32
    %165 = vector.broadcast %cst_58 : f32 to vector<64x1xf32>
    %166 = arith.mulf %164, %165 : vector<64x1xf32>
    %167 = vector.extract_strided_slice %138 {offsets = [0, 4], sizes = [64, 1], strides = [1, 1]} : vector<64x6xf32> to vector<64x1xf32>
    %168 = vector.extract_strided_slice %138 {offsets = [0, 5], sizes = [64, 1], strides = [1, 1]} : vector<64x6xf32> to vector<64x1xf32>
    %169 = arith.mulf %167, %168 : vector<64x1xf32>
    %cst_59 = arith.constant -1.000000e+00 : f32
    %170 = vector.broadcast %cst_59 : f32 to vector<64x1xf32>
    %171 = arith.select %41, %169, %170 : vector<64x1xi1>, vector<64x1xf32>
    %cst_60 = arith.constant 5.000000e-01 : f32
    %172 = vector.broadcast %cst_60 : f32 to vector<64x1xf32>
    %173 = arith.mulf %172, %160 : vector<64x1xf32>
    %174 = arith.subf %146, %173 : vector<64x1xf32>
    %cst_61 = arith.constant 5.000000e-01 : f32
    %175 = vector.broadcast %cst_61 : f32 to vector<64x1xf32>
    %176 = arith.mulf %175, %166 : vector<64x1xf32>
    %177 = arith.subf %154, %176 : vector<64x1xf32>
    %cst_62 = arith.constant 5.000000e-01 : f32
    %178 = vector.broadcast %cst_62 : f32 to vector<64x1xf32>
    %179 = arith.mulf %178, %160 : vector<64x1xf32>
    %180 = arith.addf %146, %179 : vector<64x1xf32>
    %cst_63 = arith.constant 5.000000e-01 : f32
    %181 = vector.broadcast %cst_63 : f32 to vector<64x1xf32>
    %182 = arith.mulf %181, %166 : vector<64x1xf32>
    %183 = arith.addf %154, %182 : vector<64x1xf32>
    %cst_64 = arith.constant 0.000000e+00 : f32
    %184 = vector.broadcast %cst_64 : f32 to vector<64x3xf32>
    %185 = tpu.concatenate %174, %177, %180, %183, %171, %184 in 1 : vector<64x1xf32>, vector<64x1xf32>, vector<64x1xf32>, vector<64x1xf32>, vector<64x1xf32>, vector<64x3xf32> -> vector<64x8xf32>
    %cst_65 = arith.constant 0.000000e+00 : f32
    %186 = vector.broadcast %cst_65 : f32 to vector<64x104xf32>
    %187 = tpu.concatenate %89, %137, %185, %186 in 1 : vector<64x8xf32>, vector<64x8xf32>, vector<64x8xf32>, vector<64x104xf32> -> vector<64x128xf32>
    %c0_66 = arith.constant 0 : index
    %c0_67 = arith.constant 0 : index
    %188 = vector.load %arg6[%c0_66, %c0_67] : memref<64x128xf32, #tpu.memory_space<vmem>>, vector<64x128xf32>
    tpu.vector_store %arg6[%c0_66, %c0_67], %187 {strides = array<i32>} : memref<64x128xf32, #tpu.memory_space<vmem>>, vector<64x128xf32>,
    return
  }
  func.func @transform_0(%arg0: i32) -> (i32, i32) {
    %c0_i32 = arith.constant 0 : i32
    %c0_i32_0 = arith.constant 0 : i32
    return %arg0, %c0_i32 : i32, i32
  }
  func.func @transform_1(%arg0: i32) -> (i32, i32) {
    %c0_i32 = arith.constant 0 : i32
    %c0_i32_0 = arith.constant 0 : i32
    %c0_i32_1 = arith.constant 0 : i32
    return %c0_i32, %c0_i32_0 : i32, i32
  }
  func.func @transform_2(%arg0: i32) -> (i32, i32) {
    %c0_i32 = arith.constant 0 : i32
    %c0_i32_0 = arith.constant 0 : i32
    %c0_i32_1 = arith.constant 0 : i32
    return %c0_i32, %c0_i32_0 : i32, i32
  }
  func.func @transform_3(%arg0: i32) -> (i32, i32) {
    %c0_i32 = arith.constant 0 : i32
    %c0_i32_0 = arith.constant 0 : i32
    %c0_i32_1 = arith.constant 0 : i32
    return %c0_i32, %c0_i32_0 : i32, i32
  }
  func.func @transform_4(%arg0: i32) -> (i32, i32) {
    %c0_i32 = arith.constant 0 : i32
    %c0_i32_0 = arith.constant 0 : i32
    %c0_i32_1 = arith.constant 0 : i32
    return %c0_i32, %c0_i32_0 : i32, i32
  }
  func.func @transform_5(%arg0: i32) -> (i32, i32) {
    %c0_i32 = arith.constant 0 : i32
    %c0_i32_0 = arith.constant 0 : i32
    return %arg0, %c0_i32 : i32, i32
  }
}

</mosaic_0001>

<llo_original>
// kernel: _detect.2
$region0: #{_detect.2}
  #allocation0 [shape = 'u32[]', space=smem, size = 0x4, offset = 0x4, fixed_abs, tag = 'smem constant byte address 0x4 - core index']
  #allocation1 [shape = 'u32[144,128]{1,0:T(1,128)}', space=vmem, size = 0x12000, scoped, tag = 'internal scratch']
  %s0 = inlined_call_operand.vmem [shape: bf16[256,32], index: 0, kind: input, shape index: {}]
  %s1 = inlined_call_operand.vmem [shape: bf16[32,16], index: 1, kind: input, shape index: {}]
  %s2 = inlined_call_operand.vmem [shape: f32[1,16], index: 2, kind: input, shape index: {}]
  %s3 = inlined_call_operand.vmem [shape: bf16[256,16], index: 3, kind: output, shape index: {}]
  %s4 = sld [smem:[#allocation0]]
  $region22: #{_detect.2} parent=0
    _
  %s6 = ssub.s32 1, %s4
  %s7 = scalar_select 0, %s6, %s4
  // Predicated region
  $region2: #{_detect.2} parent=0 // pred_check
    _
  $region3: #{_detect.2} parent=0 // pred_check_branch
    %9 = sbr.rel (0) target = $region5
  $region4: #{_detect.2} parent=0 // pred_region
    _
  $region5: #{_detect.2} parent=0 // pred_fallthru
    _
  // Predicated region
  $region6: #{_detect.2} parent=0 // pred_check
    _
  $region7: #{_detect.2} parent=0 // pred_check_branch
    %11 = sbr.rel (0) target = $region9
  $region8: #{_detect.2} parent=0 // pred_region
    _
  $region9: #{_detect.2} parent=0 // pred_fallthru
    _
  // Predicated region
  $region10: #{_detect.2} parent=0 // pred_check
    _
  $region11: #{_detect.2} parent=0 // pred_check_branch
    %13 = sbr.rel (0) target = $region13
  $region12: #{_detect.2} parent=0 // pred_region
    _
  $region13: #{_detect.2} parent=0 // pred_fallthru
    _
  %v15 = vld [vmem:[%s0] sm:$0xf]
  %v16 = vld [vmem:[%s0 + $0x4] sm:$0xf]
  %v17 = vld [vmem:[%s0 + $0x8] sm:$0xf]
  %v18 = vld [vmem:[%s0 + $0xc] sm:$0xf]
  %v19 = vld [vmem:[%s0 + $0x10] sm:$0xf]
  %v20 = vld [vmem:[%s0 + $0x14] sm:$0xf]
  %v21 = vld [vmem:[%s0 + $0x18] sm:$0xf]
  %v22 = vld [vmem:[%s0 + $0x1c] sm:$0xf]
  %v23 = vld [vmem:[%s0 + $0x20] sm:$0xf]
  %v24 = vld [vmem:[%s0 + $0x24] sm:$0xf]
  %v25 = vld [vmem:[%s0 + $0x28] sm:$0xf]
  %v26 = vld [vmem:[%s0 + $0x2c] sm:$0xf]
  %v27 = vld [vmem:[%s0 + $0x30] sm:$0xf]
  %v28 = vld [vmem:[%s0 + $0x34] sm:$0xf]
  %v29 = vld [vmem:[%s0 + $0x38] sm:$0xf]
  %v30 = vld [vmem:[%s0 + $0x3c] sm:$0xf]
  %v31 = vld [vmem:[%s0 + $0x40] sm:$0xf]
  %v32 = vld [vmem:[%s0 + $0x44] sm:$0xf]
  %v33 = vld [vmem:[%s0 + $0x48] sm:$0xf]
  %v34 = vld [vmem:[%s0 + $0x4c] sm:$0xf]
  %v35 = vld [vmem:[%s0 + $0x50] sm:$0xf]
  %v36 = vld [vmem:[%s0 + $0x54] sm:$0xf]
  %v37 = vld [vmem:[%s0 + $0x58] sm:$0xf]
  %v38 = vld [vmem:[%s0 + $0x5c] sm:$0xf]
  %v39 = vld [vmem:[%s0 + $0x60] sm:$0xf]
  %v40 = vld [vmem:[%s0 + $0x64] sm:$0xf]
  %v41 = vld [vmem:[%s0 + $0x68] sm:$0xf]
  %v42 = vld [vmem:[%s0 + $0x6c] sm:$0xf]
  %v43 = vld [vmem:[%s0 + $0x70] sm:$0xf]
  %v44 = vld [vmem:[%s0 + $0x74] sm:$0xf]
  %v45 = vld [vmem:[%s0 + $0x78] sm:$0xf]
  %v46 = vld [vmem:[%s0 + $0x7c] sm:$0xf]
  %v47 = vld [vmem:[%s1] sm:$0xf]
  %v48 = vld [vmem:[%s1 + $0x4] sm:$0xf]
  %v49 = vld [vmem:[%s1 + $0x8] sm:$0xf]
  %v50 = vld [vmem:[%s1 + $0xc] sm:$0xf]
  %v51 = vld [vmem:[%s2] sm:$0x1]
  %v53 = vlaneseq
  %v54 = vshrl.u32 %v53, 7
  %v55 = vsub.s32 0, %v54
  %v56 = vrot.slane %v51, %v55
  %v90 = vunpack.c.l.b16 %v15
  %v91 = vunpack.c.l.b16 %v16
  %v92 = vunpack.c.l.b16 %v17
  %v93 = vunpack.c.l.b16 %v18
  %v94 = vunpack.c.l.b16 %v19
  %v95 = vunpack.c.l.b16 %v20
  %v96 = vunpack.c.l.b16 %v21
  %v97 = vunpack.c.l.b16 %v22
  %v98 = vunpack.c.l.b16 %v23
  %v99 = vunpack.c.l.b16 %v24
  %v100 = vunpack.c.l.b16 %v25
  %v101 = vunpack.c.l.b16 %v26
  %v102 = vunpack.c.l.b16 %v27
  %v103 = vunpack.c.l.b16 %v28
  %v104 = vunpack.c.l.b16 %v29
  %v105 = vunpack.c.l.b16 %v30
  %v106 = vunpack.c.l.b16 %v31
  %v107 = vunpack.c.l.b16 %v32
  %v108 = vunpack.c.l.b16 %v33
  %v109 = vunpack.c.l.b16 %v34
  %v110 = vunpack.c.l.b16 %v35
  %v111 = vunpack.c.l.b16 %v36
  %v112 = vunpack.c.l.b16 %v37
  %v113 = vunpack.c.l.b16 %v38
  %v114 = vunpack.c.l.b16 %v39
  %v115 = vunpack.c.l.b16 %v40
  %v116 = vunpack.c.l.b16 %v41
  %v117 = vunpack.c.l.b16 %v42
  %v118 = vunpack.c.l.b16 %v43
  %v119 = vunpack.c.l.b16 %v44
  %v120 = vunpack.c.l.b16 %v45
  %v121 = vunpack.c.l.b16 %v46
  %v122 = vpack.c.b16 %v91, %v90
  %v123 = vpack.c.b16 %v93, %v92
  %v124 = vpack.c.b16 %v95, %v94
  %v125 = vpack.c.b16 %v97, %v96
  %v126 = vpack.c.b16 %v99, %v98
  %v127 = vpack.c.b16 %v101, %v100
  %v128 = vpack.c.b16 %v103, %v102
  %v129 = vpack.c.b16 %v105, %v104
  %v130 = vpack.c.b16 %v107, %v106
  %v131 = vpack.c.b16 %v109, %v108
  %v132 = vpack.c.b16 %v111, %v110
  %v133 = vpack.c.b16 %v113, %v112
  %v134 = vpack.c.b16 %v115, %v114
  %v135 = vpack.c.b16 %v117, %v116
  %v136 = vpack.c.b16 %v119, %v118
  %v137 = vpack.c.b16 %v121, %v120
  %v142 = vunpack.c.l.b16 %v47
  %v143 = vunpack.c.l.b16 %v48
  %v144 = vunpack.c.l.b16 %v49
  %v145 = vunpack.c.l.b16 %v50
  %v146 = vpack.c.b16 %v143, %v142
  %v147 = vpack.c.b16 %v145, %v144
  %vm150 = vcmask 261120
  %v152 = vsel %vm150, %v122, 0
  %v155 = vsel %vm150, %v123, 0
  %v158 = vsel %vm150, %v124, 0
  %v161 = vsel %vm150, %v125, 0
  %v164 = vsel %vm150, %v126, 0
  %v167 = vsel %vm150, %v127, 0
  %v170 = vsel %vm150, %v128, 0
  %v173 = vsel %vm150, %v129, 0
  %v176 = vsel %vm150, %v130, 0
  %v179 = vsel %vm150, %v131, 0
  %v182 = vsel %vm150, %v132, 0
  %v185 = vsel %vm150, %v133, 0
  %v188 = vsel %vm150, %v134, 0
  %v191 = vsel %vm150, %v135, 0
  %v194 = vsel %vm150, %v136, 0
  %v197 = vsel %vm150, %v137, 0
  %199 = vmatprep.subr.bf16.mxu0 0
  %200 = vmatpush1.bf16.msra.mxu0 0
  %201 = vmatprep.subr.bf16.mxu0 0
  %202 = vmatpush1.bf16.msra.mxu0 0
  %203 = vmatprep.subr.bf16.mxu0 0
  %204 = vmatpush1.bf16.msra.mxu0 0
  %205 = vmatprep.subr.bf16.mxu0 0
  %206 = vmatpush1.bf16.msra.mxu0 0
  %207 = vmatprep.subr.bf16.mxu0 0
  %208 = vmatpush1.bf16.msra.mxu0 0
  %209 = vmatprep.subr.bf16.mxu0 0
  %210 = vmatpush1.bf16.msra.mxu0 0
  %211 = vmatprep.subr.bf16.mxu0 0
  %212 = vmatpush1.bf16.msra.mxu0 %v147
  %213 = vmatprep.subr.bf16.mxu0 0
  %214 = vmatpush1.bf16.msra.mxu0 %v146
  %215 = vmatprep.subr.bf16.mxu0 0
  %216 = vmatpush2.bf16.msra.mxu0 0
  %217 = vmatprep.subr.bf16.mxu0 0
  %218 = vmatpush2.bf16.msra.mxu0 0
  %219 = vmatprep.subr.bf16.mxu0 0
  %220 = vmatpush2.bf16.msra.mxu0 0
  %221 = vmatprep.subr.bf16.mxu0 0
  %222 = vmatpush2.bf16.msra.mxu0 0
  %223 = vmatprep.subr.bf16.mxu0 0
  %224 = vmatpush2.bf16.msra.mxu0 0
  %225 = vmatprep.subr.bf16.mxu0 0
  %226 = vmatpush2.bf16.msra.mxu0 0
  %227 = vmatprep.subr.bf16.mxu0 0
  %228 = vmatpush2.bf16.msra.mxu0 0
  %229 = vmatprep.subr.bf16.mxu0 0
  %230 = vmatpush2.bf16.msra.mxu0 0
  %231 = vmatprep.mubr.bf16.mxu0 0
  %232 = vmatmul.mubr.bf16.gmra.mxu0 %v152
  %v233 = vpop.f32.mrf.mxu0
  %v234 = vadd.f32 %v56, %v233
  %v235 = vpop.f32.mrf.mxu0
  %v236 = vpop.f32.mrf.mxu0
  %v237 = vadd.f32 %v56, %v236
  %v238 = vpop.f32.mrf.mxu0
  %239 = vmatprep.mubr.bf16.mxu0 0
  %240 = vmatmul.mubr.bf16.gmra.mxu0 %v155
  %v241 = vpop.f32.mrf.mxu0
  %v242 = vadd.f32 %v56, %v241
  %v243 = vpop.f32.mrf.mxu0
  %v244 = vpop.f32.mrf.mxu0
  %v245 = vadd.f32 %v56, %v244
  %v246 = vpop.f32.mrf.mxu0
  %247 = vmatprep.mubr.bf16.mxu0 0
  %248 = vmatmul.mubr.bf16.gmra.mxu0 %v158
  %v249 = vpop.f32.mrf.mxu0
  %v250 = vadd.f32 %v56, %v249
  %v251 = vpop.f32.mrf.mxu0
  %v252 = vpop.f32.mrf.mxu0
  %v253 = vadd.f32 %v56, %v252
  %v254 = vpop.f32.mrf.mxu0
  %255 = vmatprep.mubr.bf16.mxu0 0
  %256 = vmatmul.mubr.bf16.gmra.mxu0 %v161
  %v257 = vpop.f32.mrf.mxu0
  %v258 = vadd.f32 %v56, %v257
  %v259 = vpop.f32.mrf.mxu0
  %v260 = vpop.f32.mrf.mxu0
  %v261 = vadd.f32 %v56, %v260
  %v262 = vpop.f32.mrf.mxu0
  %263 = vmatprep.mubr.bf16.mxu0 0
  %264 = vmatmul.mubr.bf16.gmra.mxu0 %v164
  %v265 = vpop.f32.mrf.mxu0
  %v266 = vadd.f32 %v56, %v265
  %v267 = vpop.f32.mrf.mxu0
  %v268 = vpop.f32.mrf.mxu0
  %v269 = vadd.f32 %v56, %v268
  %v270 = vpop.f32.mrf.mxu0
  %271 = vmatprep.mubr.bf16.mxu0 0
  %272 = vmatmul.mubr.bf16.gmra.mxu0 %v167
  %v273 = vpop.f32.mrf.mxu0
  %v274 = vadd.f32 %v56, %v273
  %v275 = vpop.f32.mrf.mxu0
  %v276 = vpop.f32.mrf.mxu0
  %v277 = vadd.f32 %v56, %v276
  %v278 = vpop.f32.mrf.mxu0
  %279 = vmatprep.mubr.bf16.mxu0 0
  %280 = vmatmul.mubr.bf16.gmra.mxu0 %v170
  %v281 = vpop.f32.mrf.mxu0
  %v282 = vadd.f32 %v56, %v281
  %v283 = vpop.f32.mrf.mxu0
  %v284 = vpop.f32.mrf.mxu0
  %v285 = vadd.f32 %v56, %v284
  %v286 = vpop.f32.mrf.mxu0
  %287 = vmatprep.mubr.bf16.mxu0 0
  %288 = vmatmul.mubr.bf16.gmra.mxu0 %v173
  %v289 = vpop.f32.mrf.mxu0
  %v290 = vadd.f32 %v56, %v289
  %v291 = vpop.f32.mrf.mxu0
  %v292 = vpop.f32.mrf.mxu0
  %v293 = vadd.f32 %v56, %v292
  %v294 = vpop.f32.mrf.mxu0
  %295 = vmatprep.mubr.bf16.mxu0 0
  %296 = vmatmul.mubr.bf16.gmra.mxu0 %v176
  %v297 = vpop.f32.mrf.mxu0
  %v298 = vadd.f32 %v56, %v297
  %v299 = vpop.f32.mrf.mxu0
  %v300 = vpop.f32.mrf.mxu0
  %v301 = vadd.f32 %v56, %v300
  %v302 = vpop.f32.mrf.mxu0
  %303 = vmatprep.mubr.bf16.mxu0 0
  %304 = vmatmul.mubr.bf16.gmra.mxu0 %v179
  %v305 = vpop.f32.mrf.mxu0
  %v306 = vadd.f32 %v56, %v305
  %v307 = vpop.f32.mrf.mxu0
  %v308 = vpop.f32.mrf.mxu0
  %v309 = vadd.f32 %v56, %v308
  %v310 = vpop.f32.mrf.mxu0
  %311 = vmatprep.mubr.bf16.mxu0 0
  %312 = vmatmul.mubr.bf16.gmra.mxu0 %v182
  %v313 = vpop.f32.mrf.mxu0
  %v314 = vadd.f32 %v56, %v313
  %v315 = vpop.f32.mrf.mxu0
  %v316 = vpop.f32.mrf.mxu0
  %v317 = vadd.f32 %v56, %v316
  %v318 = vpop.f32.mrf.mxu0
  %319 = vmatprep.mubr.bf16.mxu0 0
  %320 = vmatmul.mubr.bf16.gmra.mxu0 %v185
  %v321 = vpop.f32.mrf.mxu0
  %v322 = vadd.f32 %v56, %v321
  %v323 = vpop.f32.mrf.mxu0
  %v324 = vpop.f32.mrf.mxu0
  %v325 = vadd.f32 %v56, %v324
  %v326 = vpop.f32.mrf.mxu0
  %327 = vmatprep.mubr.bf16.mxu0 0
  %328 = vmatmul.mubr.bf16.gmra.mxu0 %v188
  %v329 = vpop.f32.mrf.mxu0
  %v330 = vadd.f32 %v56, %v329
  %v331 = vpop.f32.mrf.mxu0
  %v332 = vpop.f32.mrf.mxu0
  %v333 = vadd.f32 %v56, %v332
  %v334 = vpop.f32.mrf.mxu0
  %335 = vmatprep.mubr.bf16.mxu0 0
  %336 = vmatmul.mubr.bf16.gmra.mxu0 %v191
  %v337 = vpop.f32.mrf.mxu0
  %v338 = vadd.f32 %v56, %v337
  %v339 = vpop.f32.mrf.mxu0
  %v340 = vpop.f32.mrf.mxu0
  %v341 = vadd.f32 %v56, %v340
  %v342 = vpop.f32.mrf.mxu0
  %343 = vmatprep.mubr.bf16.mxu0 0
  %344 = vmatmul.mubr.bf16.gmra.mxu0 %v194
  %v345 = vpop.f32.mrf.mxu0
  %v346 = vadd.f32 %v56, %v345
  %v347 = vpop.f32.mrf.mxu0
  %v348 = vpop.f32.mrf.mxu0
  %v349 = vadd.f32 %v56, %v348
  %v350 = vpop.f32.mrf.mxu0
  %351 = vmatprep.mubr.bf16.mxu0 0
  %352 = vmatmul.mubr.bf16.gmra.mxu0 %v197
  %v353 = vpop.f32.mrf.mxu0
  %v354 = vadd.f32 %v56, %v353
  %v355 = vpop.f32.mrf.mxu0
  %v356 = vpop.f32.mrf.mxu0
  %v357 = vadd.f32 %v56, %v356
  %v358 = vpop.f32.mrf.mxu0
  %359 = vdwg.mxu0
  %v360 = vxor.u32 %v234, 2147483648
  %v361 = vxor.u32 %v237, 2147483648
  %v362 = vxor.u32 %v242, 2147483648
  %v363 = vxor.u32 %v245, 2147483648
  %v364 = vxor.u32 %v250, 2147483648
  %v365 = vxor.u32 %v253, 2147483648
  %v366 = vxor.u32 %v258, 2147483648
  %v367 = vxor.u32 %v261, 2147483648
  %v368 = vxor.u32 %v266, 2147483648
  %v369 = vxor.u32 %v269, 2147483648
  %v370 = vxor.u32 %v274, 2147483648
  %v371 = vxor.u32 %v277, 2147483648
  %v372 = vxor.u32 %v282, 2147483648
  %v373 = vxor.u32 %v285, 2147483648
  %v374 = vxor.u32 %v290, 2147483648
  %v375 = vxor.u32 %v293, 2147483648
  %v376 = vxor.u32 %v298, 2147483648
  %v377 = vxor.u32 %v301, 2147483648
  %v378 = vxor.u32 %v306, 2147483648
  %v379 = vxor.u32 %v309, 2147483648
  %v380 = vxor.u32 %v314, 2147483648
  %v381 = vxor.u32 %v317, 2147483648
  %v382 = vxor.u32 %v322, 2147483648
  %v383 = vxor.u32 %v325, 2147483648
  %v384 = vxor.u32 %v330, 2147483648
  %v385 = vxor.u32 %v333, 2147483648
  %v386 = vxor.u32 %v338, 2147483648
  %v387 = vxor.u32 %v341, 2147483648
  %v388 = vxor.u32 %v346, 2147483648
  %v389 = vxor.u32 %v349, 2147483648
  %v390 = vxor.u32 %v354, 2147483648
  %v391 = vxor.u32 %v357, 2147483648
  %v392 = vmul.f32 %v360, 1.442695
  %v393 = vpow.pop %v392
  %v394 = vmul.f32 %v361, 1.442695
  %v395 = vpow.pop %v394
  %v396 = vmul.f32 %v362, 1.442695
  %v397 = vpow.pop %v396
  %v398 = vmul.f32 %v363, 1.442695
  %v399 = vpow.pop %v398
  %v400 = vmul.f32 %v364, 1.442695
  %v401 = vpow.pop %v400
  %v402 = vmul.f32 %v365, 1.442695
  %v403 = vpow.pop %v402
  %v404 = vmul.f32 %v366, 1.442695
  %v405 = vpow.pop %v404
  %v406 = vmul.f32 %v367, 1.442695
  %v407 = vpow.pop %v406
  %v408 = vmul.f32 %v368, 1.442695
  %v409 = vpow.pop %v408
  %v410 = vmul.f32 %v369, 1.442695
  %v411 = vpow.pop %v410
  %v412 = vmul.f32 %v370, 1.442695
  %v413 = vpow.pop %v412
  %v414 = vmul.f32 %v371, 1.442695
  %v415 = vpow.pop %v414
  %v416 = vmul.f32 %v372, 1.442695
  %v417 = vpow.pop %v416
  %v418 = vmul.f32 %v373, 1.442695
  %v419 = vpow.pop %v418
  %v420 = vmul.f32 %v374, 1.442695
  %v421 = vpow.pop %v420
  %v422 = vmul.f32 %v375, 1.442695
  %v423 = vpow.pop %v422
  %v424 = vmul.f32 %v376, 1.442695
  %v425 = vpow.pop %v424
  %v426 = vmul.f32 %v377, 1.442695
  %v427 = vpow.pop %v426
  %v428 = vmul.f32 %v378, 1.442695
  %v429 = vpow.pop %v428
  %v430 = vmul.f32 %v379, 1.442695
  %v431 = vpow.pop %v430
  %v432 = vmul.f32 %v380, 1.442695
  %v433 = vpow.pop %v432
  %v434 = vmul.f32 %v381, 1.442695
  %v435 = vpow.pop %v434
  %v436 = vmul.f32 %v382, 1.442695
  %v437 = vpow.pop %v436
  %v438 = vmul.f32 %v383, 1.442695
  %v439 = vpow.pop %v438
  %v440 = vmul.f32 %v384, 1.442695
  %v441 = vpow.pop %v440
  %v442 = vmul.f32 %v385, 1.442695
  %v443 = vpow.pop %v442
  %v444 = vmul.f32 %v386, 1.442695
  %v445 = vpow.pop %v444
  %v446 = vmul.f32 %v387, 1.442695
  %v447 = vpow.pop %v446
  %v448 = vmul.f32 %v388, 1.442695
  %v449 = vpow.pop %v448
  %v450 = vmul.f32 %v389, 1.442695
  %v451 = vpow.pop %v450
  %v452 = vmul.f32 %v390, 1.442695
  %v453 = vpow.pop %v452
  %v454 = vmul.f32 %v391, 1.442695
  %v455 = vpow.pop %v454
  %v456 = vadd.f32 %v393, 1.0
  %v457 = vadd.f32 %v395, 1.0
  %v458 = vadd.f32 %v397, 1.0
  %v459 = vadd.f32 %v399, 1.0
  %v460 = vadd.f32 %v401, 1.0
  %v461 = vadd.f32 %v403, 1.0
  %v462 = vadd.f32 %v405, 1.0
  %v463 = vadd.f32 %v407, 1.0
  %v464 = vadd.f32 %v409, 1.0
  %v465 = vadd.f32 %v411, 1.0
  %v466 = vadd.f32 %v413, 1.0
  %v467 = vadd.f32 %v415, 1.0
  %v468 = vadd.f32 %v417, 1.0
  %v469 = vadd.f32 %v419, 1.0
  %v470 = vadd.f32 %v421, 1.0
  %v471 = vadd.f32 %v423, 1.0
  %v472 = vadd.f32 %v425, 1.0
  %v473 = vadd.f32 %v427, 1.0
  %v474 = vadd.f32 %v429, 1.0
  %v475 = vadd.f32 %v431, 1.0
  %v476 = vadd.f32 %v433, 1.0
  %v477 = vadd.f32 %v435, 1.0
  %v478 = vadd.f32 %v437, 1.0
  %v479 = vadd.f32 %v439, 1.0
  %v480 = vadd.f32 %v441, 1.0
  %v481 = vadd.f32 %v443, 1.0
  %v482 = vadd.f32 %v445, 1.0
  %v483 = vadd.f32 %v447, 1.0
  %v484 = vadd.f32 %v449, 1.0
  %v485 = vadd.f32 %v451, 1.0
  %v486 = vadd.f32 %v453, 1.0
  %v487 = vadd.f32 %v455, 1.0
  %v488 = vrcp.pop %v456
  %v489 = vmul.f32 1.0, %v488
  %v490 = vrcp.pop %v457
  %v491 = vmul.f32 1.0, %v490
  %v492 = vrcp.pop %v458
  %v493 = vmul.f32 1.0, %v492
  %v494 = vrcp.pop %v459
  %v495 = vmul.f32 1.0, %v494
  %v496 = vrcp.pop %v460
  %v497 = vmul.f32 1.0, %v496
  %v498 = vrcp.pop %v461
  %v499 = vmul.f32 1.0, %v498
  %v500 = vrcp.pop %v462
  %v501 = vmul.f32 1.0, %v500
  %v502 = vrcp.pop %v463
  %v503 = vmul.f32 1.0, %v502
  %v504 = vrcp.pop %v464
  %v505 = vmul.f32 1.0, %v504
  %v506 = vrcp.pop %v465
  %v507 = vmul.f32 1.0, %v506
  %v508 = vrcp.pop %v466
  %v509 = vmul.f32 1.0, %v508
  %v510 = vrcp.pop %v467
  %v511 = vmul.f32 1.0, %v510
  %v512 = vrcp.pop %v468
  %v513 = vmul.f32 1.0, %v512
  %v514 = vrcp.pop %v469
  %v515 = vmul.f32 1.0, %v514
  %v516 = vrcp.pop %v470
  %v517 = vmul.f32 1.0, %v516
  %v518 = vrcp.pop %v471
  %v519 = vmul.f32 1.0, %v518
  %v520 = vrcp.pop %v472
  %v521 = vmul.f32 1.0, %v520
  %v522 = vrcp.pop %v473
  %v523 = vmul.f32 1.0, %v522
  %v524 = vrcp.pop %v474
  %v525 = vmul.f32 1.0, %v524
  %v526 = vrcp.pop %v475
  %v527 = vmul.f32 1.0, %v526
  %v528 = vrcp.pop %v476
  %v529 = vmul.f32 1.0, %v528
  %v530 = vrcp.pop %v477
  %v531 = vmul.f32 1.0, %v530
  %v532 = vrcp.pop %v478
  %v533 = vmul.f32 1.0, %v532
  %v534 = vrcp.pop %v479
  %v535 = vmul.f32 1.0, %v534
  %v536 = vrcp.pop %v480
  %v537 = vmul.f32 1.0, %v536
  %v538 = vrcp.pop %v481
  %v539 = vmul.f32 1.0, %v538
  %v540 = vrcp.pop %v482
  %v541 = vmul.f32 1.0, %v540
  %v542 = vrcp.pop %v483
  %v543 = vmul.f32 1.0, %v542
  %v544 = vrcp.pop %v484
  %v545 = vmul.f32 1.0, %v544
  %v546 = vrcp.pop %v485
  %v547 = vmul.f32 1.0, %v546
  %v548 = vrcp.pop %v486
  %v549 = vmul.f32 1.0, %v548
  %v550 = vrcp.pop %v487
  %v551 = vmul.f32 1.0, %v550
  %v552 = vmul.f32 %v234, %v489
  %v553 = vmul.f32 %v237, %v491
  %v554 = vmul.f32 %v242, %v493
  %v555 = vmul.f32 %v245, %v495
  %v556 = vmul.f32 %v250, %v497
  %v557 = vmul.f32 %v253, %v499
  %v558 = vmul.f32 %v258, %v501
  %v559 = vmul.f32 %v261, %v503
  %v560 = vmul.f32 %v266, %v505
  %v561 = vmul.f32 %v269, %v507
  %v562 = vmul.f32 %v274, %v509
  %v563 = vmul.f32 %v277, %v511
  %v564 = vmul.f32 %v282, %v513
  %v565 = vmul.f32 %v285, %v515
  %v566 = vmul.f32 %v290, %v517
  %v567 = vmul.f32 %v293, %v519
  %v568 = vmul.f32 %v298, %v521
  %v569 = vmul.f32 %v301, %v523
  %v570 = vmul.f32 %v306, %v525
  %v571 = vmul.f32 %v309, %v527
  %v572 = vmul.f32 %v314, %v529
  %v573 = vmul.f32 %v317, %v531
  %v574 = vmul.f32 %v322, %v533
  %v575 = vmul.f32 %v325, %v535
  %v576 = vmul.f32 %v330, %v537
  %v577 = vmul.f32 %v333, %v539
  %v578 = vmul.f32 %v338, %v541
  %v579 = vmul.f32 %v341, %v543
  %v580 = vmul.f32 %v346, %v545
  %v581 = vmul.f32 %v349, %v547
  %v582 = vmul.f32 %v354, %v549
  %v583 = vmul.f32 %v357, %v551
  %v584 = vpack.c.bf16 %v553, %v552
  %v585 = vpack.c.bf16 %v555, %v554
  %v586 = vpack.c.bf16 %v557, %v556
  %v587 = vpack.c.bf16 %v559, %v558
  %v588 = vpack.c.bf16 %v561, %v560
  %v589 = vpack.c.bf16 %v563, %v562
  %v590 = vpack.c.bf16 %v565, %v564
  %v591 = vpack.c.bf16 %v567, %v566
  %v592 = vpack.c.bf16 %v569, %v568
  %v593 = vpack.c.bf16 %v571, %v570
  %v594 = vpack.c.bf16 %v573, %v572
  %v595 = vpack.c.bf16 %v575, %v574
  %v596 = vpack.c.bf16 %v577, %v576
  %v597 = vpack.c.bf16 %v579, %v578
  %v598 = vpack.c.bf16 %v581, %v580
  %v599 = vpack.c.bf16 %v583, %v582
  %v616 = vunpack.c.l.b16 %v584
  %v617 = vunpack.c.h.b16 %v584
  %v618 = vunpack.c.l.b16 %v585
  %v619 = vunpack.c.h.b16 %v585
  %v620 = vunpack.c.l.b16 %v586
  %v621 = vunpack.c.h.b16 %v586
  %v622 = vunpack.c.l.b16 %v587
  %v623 = vunpack.c.h.b16 %v587
  %v624 = vunpack.c.l.b16 %v588
  %v625 = vunpack.c.h.b16 %v588
  %v626 = vunpack.c.l.b16 %v589
  %v627 = vunpack.c.h.b16 %v589
  %v628 = vunpack.c.l.b16 %v590
  %v629 = vunpack.c.h.b16 %v590
  %v630 = vunpack.c.l.b16 %v591
  %v631 = vunpack.c.h.b16 %v591
  %v632 = vunpack.c.l.b16 %v592
  %v633 = vunpack.c.h.b16 %v592
  %v634 = vunpack.c.l.b16 %v593
  %v635 = vunpack.c.h.b16 %v593
  %v636 = vunpack.c.l.b16 %v594
  %v637 = vunpack.c.h.b16 %v594
  %v638 = vunpack.c.l.b16 %v595
  %v639 = vunpack.c.h.b16 %v595
  %v640 = vunpack.c.l.b16 %v596
  %v641 = vunpack.c.h.b16 %v596
  %v642 = vunpack.c.l.b16 %v597
  %v643 = vunpack.c.h.b16 %v597
  %v644 = vunpack.c.l.b16 %v598
  %v645 = vunpack.c.h.b16 %v598
  %v646 = vunpack.c.l.b16 %v599
  %v647 = vunpack.c.h.b16 %v599
  %v648 = vpack.c.b16 %v616, %v616
  %v649 = vpack.c.b16 %v617, %v617
  %v650 = vpack.c.b16 %v618, %v618
  %v651 = vpack.c.b16 %v619, %v619
  %v652 = vpack.c.b16 %v620, %v620
  %v653 = vpack.c.b16 %v621, %v621
  %v654 = vpack.c.b16 %v622, %v622
  %v655 = vpack.c.b16 %v623, %v623
  %v656 = vpack.c.b16 %v624, %v624
  %v657 = vpack.c.b16 %v625, %v625
  %v658 = vpack.c.b16 %v626, %v626
  %v659 = vpack.c.b16 %v627, %v627
  %v660 = vpack.c.b16 %v628, %v628
  %v661 = vpack.c.b16 %v629, %v629
  %v662 = vpack.c.b16 %v630, %v630
  %v663 = vpack.c.b16 %v631, %v631
  %v664 = vpack.c.b16 %v632, %v632
  %v665 = vpack.c.b16 %v633, %v633
  %v666 = vpack.c.b16 %v634, %v634
  %v667 = vpack.c.b16 %v635, %v635
  %v668 = vpack.c.b16 %v636, %v636
  %v669 = vpack.c.b16 %v637, %v637
  %v670 = vpack.c.b16 %v638, %v638
  %v671 = vpack.c.b16 %v639, %v639
  %v672 = vpack.c.b16 %v640, %v640
  %v673 = vpack.c.b16 %v641, %v641
  %v674 = vpack.c.b16 %v642, %v642
  %v675 = vpack.c.b16 %v643, %v643
  %v676 = vpack.c.b16 %v644, %v644
  %v677 = vpack.c.b16 %v645, %v645
  %v678 = vpack.c.b16 %v646, %v646
  %v679 = vpack.c.b16 %v647, %v647
  %vm712 = vcmask 125952
  %713 = vst.msk [vmem:[%s3] sm:$0xf] %vm712, %v648
  %714 = vst.msk [vmem:[%s3 + $0x4] sm:$0xf] %vm712, %v649
  %715 = vst.msk [vmem:[%s3 + $0x8] sm:$0xf] %vm712, %v650
  %716 = vst.msk [vmem:[%s3 + $0xc] sm:$0xf] %vm712, %v651
  %717 = vst.msk [vmem:[%s3 + $0x10] sm:$0xf] %vm712, %v652
  %718 = vst.msk [vmem:[%s3 + $0x14] sm:$0xf] %vm712, %v653
  %719 = vst.msk [vmem:[%s3 + $0x18] sm:$0xf] %vm712, %v654
  %720 = vst.msk [vmem:[%s3 + $0x1c] sm:$0xf] %vm712, %v655
  %721 = vst.msk [vmem:[%s3 + $0x20] sm:$0xf] %vm712, %v656
  %722 = vst.msk [vmem:[%s3 + $0x24] sm:$0xf] %vm712, %v657
  %723 = vst.msk [vmem:[%s3 + $0x28] sm:$0xf] %vm712, %v658
  %724 = vst.msk [vmem:[%s3 + $0x2c] sm:$0xf] %vm712, %v659
  %725 = vst.msk [vmem:[%s3 + $0x30] sm:$0xf] %vm712, %v660
  %726 = vst.msk [vmem:[%s3 + $0x34] sm:$0xf] %vm712, %v661
  %727 = vst.msk [vmem:[%s3 + $0x38] sm:$0xf] %vm712, %v662
  %728 = vst.msk [vmem:[%s3 + $0x3c] sm:$0xf] %vm712, %v663
  %729 = vst.msk [vmem:[%s3 + $0x40] sm:$0xf] %vm712, %v664
  %730 = vst.msk [vmem:[%s3 + $0x44] sm:$0xf] %vm712, %v665
  %731 = vst.msk [vmem:[%s3 + $0x48] sm:$0xf] %vm712, %v666
  %732 = vst.msk [vmem:[%s3 + $0x4c] sm:$0xf] %vm712, %v667
  %733 = vst.msk [vmem:[%s3 + $0x50] sm:$0xf] %vm712, %v668
  %734 = vst.msk [vmem:[%s3 + $0x54] sm:$0xf] %vm712, %v669
  %735 = vst.msk [vmem:[%s3 + $0x58] sm:$0xf] %vm712, %v670
  %736 = vst.msk [vmem:[%s3 + $0x5c] sm:$0xf] %vm712, %v671
  %737 = vst.msk [vmem:[%s3 + $0x60] sm:$0xf] %vm712, %v672
  %738 = vst.msk [vmem:[%s3 + $0x64] sm:$0xf] %vm712, %v673
  %739 = vst.msk [vmem:[%s3 + $0x68] sm:$0xf] %vm712, %v674
  %740 = vst.msk [vmem:[%s3 + $0x6c] sm:$0xf] %vm712, %v675
  %741 = vst.msk [vmem:[%s3 + $0x70] sm:$0xf] %vm712, %v676
  %742 = vst.msk [vmem:[%s3 + $0x74] sm:$0xf] %vm712, %v677
  %743 = vst.msk [vmem:[%s3 + $0x78] sm:$0xf] %vm712, %v678
  %744 = vst.msk [vmem:[%s3 + $0x7c] sm:$0xf] %vm712, %v679
  // Predicated region
  $region14: #{_detect.2} parent=0 // pred_check
    _
  $region15: #{_detect.2} parent=0 // pred_check_branch
    %746 = sbr.rel (0) target = $region17
  $region16: #{_detect.2} parent=0 // pred_region
    _
  $region17: #{_detect.2} parent=0 // pred_fallthru
    _
  // Predicated region
  $region18: #{_detect.2} parent=0 // pred_check
    _
  $region19: #{_detect.2} parent=0 // pred_check_branch
    %748 = sbr.rel (0) target = $region21
  $region20: #{_detect.2} parent=0 // pred_region
    _
  $region21: #{_detect.2} parent=0 // pred_fallthru
    _

// kernel: _detect.3
$region0: #{_detect.3}
  #allocation0 [shape = 'u32[]', space=smem, size = 0x4, offset = 0x4, fixed_abs, tag = 'smem constant byte address 0x4 - core index']
  #allocation1 [shape = 'u32[144,128]{1,0:T(1,128)}', space=vmem, size = 0x12000, scoped, tag = 'internal scratch']
  %s0 = inlined_call_operand.vmem [shape: bf16[64,144], index: 0, kind: input, shape index: {}]
  %s1 = inlined_call_operand.vmem [shape: bf16[144,32], index: 1, kind: input, shape index: {}]
  %s2 = inlined_call_operand.vmem [shape: f32[1,32], index: 2, kind: input, shape index: {}]
  %s3 = inlined_call_operand.vmem [shape: bf16[32,18], index: 3, kind: input, shape index: {}]
  %s4 = inlined_call_operand.vmem [shape: f32[1,18], index: 4, kind: input, shape index: {}]
  %s5 = inlined_call_operand.vmem [shape: f32[64,128], index: 5, kind: output, shape index: {}]
  %s6 = sld [smem:[#allocation0]]
  $region30: #{_detect.3} parent=0
    _
  %s8 = ssub.s32 1, %s6
  %s9 = scalar_select 0, %s8, %s6
  // Predicated region
  $region2: #{_detect.3} parent=0 // pred_check
    _
  $region3: #{_detect.3} parent=0 // pred_check_branch
    %11 = sbr.rel (0) target = $region5
  $region4: #{_detect.3} parent=0 // pred_region
    _
  $region5: #{_detect.3} parent=0 // pred_fallthru
    _
  // Predicated region
  $region6: #{_detect.3} parent=0 // pred_check
    _
  $region7: #{_detect.3} parent=0 // pred_check_branch
    %13 = sbr.rel (0) target = $region9
  $region8: #{_detect.3} parent=0 // pred_region
    _
  $region9: #{_detect.3} parent=0 // pred_fallthru
    _
  // Predicated region
  $region10: #{_detect.3} parent=0 // pred_check
    _
  $region11: #{_detect.3} parent=0 // pred_check_branch
    %15 = sbr.rel (0) target = $region13
  $region12: #{_detect.3} parent=0 // pred_region
    _
  $region13: #{_detect.3} parent=0 // pred_fallthru
    _
  // Predicated region
  $region14: #{_detect.3} parent=0 // pred_check
    _
  $region15: #{_detect.3} parent=0 // pred_check_branch
    %17 = sbr.rel (0) target = $region17
  $region16: #{_detect.3} parent=0 // pred_region
    _
  $region17: #{_detect.3} parent=0 // pred_fallthru
    _
  // Predicated region
  $region18: #{_detect.3} parent=0 // pred_check
    _
  $region19: #{_detect.3} parent=0 // pred_check_branch
    %19 = sbr.rel (0) target = $region21
  $region20: #{_detect.3} parent=0 // pred_region
    _
  $region21: #{_detect.3} parent=0 // pred_fallthru
    _
  %v21 = vld [vmem:[%s0] sm:$0xff]
  %v22 = vld [vmem:[%s0 + $0x8] sm:$0xff]
  %v23 = vld [vmem:[%s0 + $0x10] sm:$0xff]
  %v24 = vld [vmem:[%s0 + $0x18] sm:$0xff]
  %v25 = vld [vmem:[%s0 + $0x20] sm:$0xff]
  %v26 = vld [vmem:[%s0 + $0x28] sm:$0xff]
  %v27 = vld [vmem:[%s0 + $0x30] sm:$0xff]
  %v28 = vld [vmem:[%s0 + $0x38] sm:$0xff]
  %v29 = vld [vmem:[%s1] sm:$0xf]
  %v30 = vld [vmem:[%s1 + $0x4] sm:$0xf]
  %v31 = vld [vmem:[%s1 + $0x8] sm:$0xf]
  %v32 = vld [vmem:[%s1 + $0xc] sm:$0xf]
  %v33 = vld [vmem:[%s1 + $0x10] sm:$0xf]
  %v34 = vld [vmem:[%s1 + $0x14] sm:$0xf]
  %v35 = vld [vmem:[%s1 + $0x18] sm:$0xf]
  %v36 = vld [vmem:[%s1 + $0x1c] sm:$0xf]
  %v37 = vld [vmem:[%s1 + $0x20] sm:$0xf]
  %v38 = vld [vmem:[%s1 + $0x24] sm:$0xf]
  %v39 = vld [vmem:[%s1 + $0x28] sm:$0xf]
  %v40 = vld [vmem:[%s1 + $0x2c] sm:$0xf]
  %v41 = vld [vmem:[%s1 + $0x30] sm:$0xf]
  %v42 = vld [vmem:[%s1 + $0x34] sm:$0xf]
  %v43 = vld [vmem:[%s1 + $0x38] sm:$0xf]
  %v44 = vld [vmem:[%s1 + $0x3c] sm:$0xf]
  %v45 = vld [vmem:[%s1 + $0x40] sm:$0xf]
  %v46 = vld [vmem:[%s1 + $0x44] sm:$0xf]
  %v47 = vld [vmem:[%s2] sm:$0x1]
  %v49 = vlaneseq
  %v50 = vshrl.u32 %v49, 7
  %v51 = vsub.s32 0, %v50
  %v52 = vrot.slane %v47, %v51
  %v62 = vunpack.c.l.b16 %v21
  %v63 = vunpack.c.h.b16 %v21
  %v64 = vunpack.c.l.b16 %v22
  %v65 = vunpack.c.h.b16 %v22
  %v66 = vunpack.c.l.b16 %v23
  %v67 = vunpack.c.h.b16 %v23
  %v68 = vunpack.c.l.b16 %v24
  %v69 = vunpack.c.h.b16 %v24
  %v70 = vunpack.c.l.b16 %v25
  %v71 = vunpack.c.h.b16 %v25
  %v72 = vunpack.c.l.b16 %v26
  %v73 = vunpack.c.h.b16 %v26
  %v74 = vunpack.c.l.b16 %v27
  %v75 = vunpack.c.h.b16 %v27
  %v76 = vunpack.c.l.b16 %v28
  %v77 = vunpack.c.h.b16 %v28
  %v78 = vpack.c.b16 %v64, %v62
  %v79 = vpack.c.b16 %v65, %v63
  %v80 = vpack.c.b16 %v68, %v66
  %v81 = vpack.c.b16 %v69, %v67
  %v82 = vpack.c.b16 %v72, %v70
  %v83 = vpack.c.b16 %v73, %v71
  %v84 = vpack.c.b16 %v76, %v74
  %v85 = vpack.c.b16 %v77, %v75
  %v108 = vunpack.c.l.b16 %v29
  %v109 = vunpack.c.l.b16 %v30
  %v110 = vunpack.c.l.b16 %v31
  %v111 = vunpack.c.l.b16 %v32
  %v112 = vunpack.c.l.b16 %v33
  %v113 = vunpack.c.l.b16 %v34
  %v114 = vunpack.c.l.b16 %v35
  %v115 = vunpack.c.l.b16 %v36
  %v116 = vunpack.c.l.b16 %v37
  %v117 = vunpack.c.l.b16 %v38
  %v118 = vunpack.c.l.b16 %v39
  %v119 = vunpack.c.l.b16 %v40
  %v120 = vunpack.c.l.b16 %v41
  %v121 = vunpack.c.l.b16 %v42
  %v122 = vunpack.c.l.b16 %v43
  %v123 = vunpack.c.l.b16 %v44
  %v124 = vunpack.c.l.b16 %v45
  %v125 = vunpack.c.l.b16 %v46
  %v126 = vpack.c.b16 %v109, %v108
  %v127 = vpack.c.b16 %v111, %v110
  %v128 = vpack.c.b16 %v113, %v112
  %v129 = vpack.c.b16 %v115, %v114
  %v130 = vpack.c.b16 %v117, %v116
  %v131 = vpack.c.b16 %v119, %v118
  %v132 = vpack.c.b16 %v121, %v120
  %v133 = vpack.c.b16 %v123, %v122
  %v134 = vpack.c.b16 %v125, %v124
  %vm144 = vcmask 130048
  %v146 = vsel %vm144, %v79, 0
  %v149 = vsel %vm144, %v81, 0
  %v152 = vsel %vm144, %v83, 0
  %v155 = vsel %vm144, %v85, 0
  %157 = vmatprep.subr.bf16.mxu0 0
  %158 = vmatpush1.bf16.msra.mxu0 %v133
  %159 = vmatprep.subr.bf16.mxu0 0
  %160 = vmatpush1.bf16.msra.mxu0 %v132
  %161 = vmatprep.subr.bf16.mxu0 0
  %162 = vmatpush1.bf16.msra.mxu0 %v131
  %163 = vmatprep.subr.bf16.mxu0 0
  %164 = vmatpush1.bf16.msra.mxu0 %v130
  %165 = vmatprep.subr.bf16.mxu0 0
  %166 = vmatpush1.bf16.msra.mxu0 %v129
  %167 = vmatprep.subr.bf16.mxu0 0
  %168 = vmatpush1.bf16.msra.mxu0 %v128
  %169 = vmatprep.subr.bf16.mxu0 0
  %170 = vmatpush1.bf16.msra.mxu0 %v127
  %171 = vmatprep.subr.bf16.mxu0 0
  %172 = vmatpush1.bf16.msra.mxu0 %v126
  %173 = vmatprep.subr.bf16.mxu0 0
  %174 = vmatpush2.bf16.msra.mxu0 0
  %175 = vmatprep.subr.bf16.mxu0 0
  %176 = vmatpush2.bf16.msra.mxu0 0
  %177 = vmatprep.subr.bf16.mxu0 0
  %178 = vmatpush2.bf16.msra.mxu0 0
  %179 = vmatprep.subr.bf16.mxu0 0
  %180 = vmatpush2.bf16.msra.mxu0 0
  %181 = vmatprep.subr.bf16.mxu0 0
  %182 = vmatpush2.bf16.msra.mxu0 0
  %183 = vmatprep.subr.bf16.mxu0 0
  %184 = vmatpush2.bf16.msra.mxu0 0
  %185 = vmatprep.subr.bf16.mxu0 0
  %186 = vmatpush2.bf16.msra.mxu0 0
  %187 = vmatprep.subr.bf16.mxu0 0
  %188 = vmatpush2.bf16.msra.mxu0 %v134
  %189 = vmatprep.mubr.bf16.mxu0 %v146
  %190 = vmatmul.mubr.bf16.gmra.mxu0 %v78
  %v191 = vpop.f32.mrf.mxu0
  %v192 = vadd.f32 %v52, %v191
  %v193 = vpop.f32.mrf.mxu0
  %v194 = vpop.f32.mrf.mxu0
  %v195 = vadd.f32 %v52, %v194
  %v196 = vpop.f32.mrf.mxu0
  %197 = vmatprep.mubr.bf16.mxu0 %v149
  %198 = vmatmul.mubr.bf16.gmra.mxu0 %v80
  %v199 = vpop.f32.mrf.mxu0
  %v200 = vadd.f32 %v52, %v199
  %v201 = vpop.f32.mrf.mxu0
  %v202 = vpop.f32.mrf.mxu0
  %v203 = vadd.f32 %v52, %v202
  %v204 = vpop.f32.mrf.mxu0
  %205 = vmatprep.mubr.bf16.mxu0 %v152
  %206 = vmatmul.mubr.bf16.gmra.mxu0 %v82
  %v207 = vpop.f32.mrf.mxu0
  %v208 = vadd.f32 %v52, %v207
  %v209 = vpop.f32.mrf.mxu0
  %v210 = vpop.f32.mrf.mxu0
  %v211 = vadd.f32 %v52, %v210
  %v212 = vpop.f32.mrf.mxu0
  %213 = vmatprep.mubr.bf16.mxu0 %v155
  %214 = vmatmul.mubr.bf16.gmra.mxu0 %v84
  %v215 = vpop.f32.mrf.mxu0
  %v216 = vadd.f32 %v52, %v215
  %v217 = vpop.f32.mrf.mxu0
  %v218 = vpop.f32.mrf.mxu0
  %v219 = vadd.f32 %v52, %v218
  %v220 = vpop.f32.mrf.mxu0
  %221 = vdwg.mxu0
  %v222 = vxor.u32 %v192, 2147483648
  %v223 = vxor.u32 %v195, 2147483648
  %v224 = vxor.u32 %v200, 2147483648
  %v225 = vxor.u32 %v203, 2147483648
  %v226 = vxor.u32 %v208, 2147483648
  %v227 = vxor.u32 %v211, 2147483648
  %v228 = vxor.u32 %v216, 2147483648
  %v229 = vxor.u32 %v219, 2147483648
  %v230 = vmul.f32 %v222, 1.442695
  %v231 = vpow.pop %v230
  %v232 = vmul.f32 %v223, 1.442695
  %v233 = vpow.pop %v232
  %v234 = vmul.f32 %v224, 1.442695
  %v235 = vpow.pop %v234
  %v236 = vmul.f32 %v225, 1.442695
  %v237 = vpow.pop %v236
  %v238 = vmul.f32 %v226, 1.442695
  %v239 = vpow.pop %v238
  %v240 = vmul.f32 %v227, 1.442695
  %v241 = vpow.pop %v240
  %v242 = vmul.f32 %v228, 1.442695
  %v243 = vpow.pop %v242
  %v244 = vmul.f32 %v229, 1.442695
  %v245 = vpow.pop %v244
  %v246 = vadd.f32 %v231, 1.0
  %v247 = vadd.f32 %v233, 1.0
  %v248 = vadd.f32 %v235, 1.0
  %v249 = vadd.f32 %v237, 1.0
  %v250 = vadd.f32 %v239, 1.0
  %v251 = vadd.f32 %v241, 1.0
  %v252 = vadd.f32 %v243, 1.0
  %v253 = vadd.f32 %v245, 1.0
  %v254 = vrcp.pop %v246
  %v255 = vmul.f32 1.0, %v254
  %v256 = vrcp.pop %v247
  %v257 = vmul.f32 1.0, %v256
  %v258 = vrcp.pop %v248
  %v259 = vmul.f32 1.0, %v258
  %v260 = vrcp.pop %v249
  %v261 = vmul.f32 1.0, %v260
  %v262 = vrcp.pop %v250
  %v263 = vmul.f32 1.0, %v262
  %v264 = vrcp.pop %v251
  %v265 = vmul.f32 1.0, %v264
  %v266 = vrcp.pop %v252
  %v267 = vmul.f32 1.0, %v266
  %v268 = vrcp.pop %v253
  %v269 = vmul.f32 1.0, %v268
  %v270 = vmul.f32 %v192, %v255
  %v271 = vmul.f32 %v195, %v257
  %v272 = vmul.f32 %v200, %v259
  %v273 = vmul.f32 %v203, %v261
  %v274 = vmul.f32 %v208, %v263
  %v275 = vmul.f32 %v211, %v265
  %v276 = vmul.f32 %v216, %v267
  %v277 = vmul.f32 %v219, %v269
  %v278 = vpack.c.bf16 %v271, %v270
  %v279 = vpack.c.bf16 %v273, %v272
  %v280 = vpack.c.bf16 %v275, %v274
  %v281 = vpack.c.bf16 %v277, %v276
  %v282 = vld [vmem:[%s3] sm:$0xf]
  %v283 = vld [vmem:[%s3 + $0x4] sm:$0xf]
  %v284 = vld [vmem:[%s3 + $0x8] sm:$0xf]
  %v285 = vld [vmem:[%s3 + $0xc] sm:$0xf]
  %v286 = vld [vmem:[%s4] sm:$0x1]
  %v288 = vlaneseq
  %v289 = vshrl.u32 %v288, 7
  %v290 = vsub.s32 0, %v289
  %v291 = vrot.slane %v286, %v290
  %v297 = vunpack.c.l.b16 %v282
  %v298 = vunpack.c.l.b16 %v283
  %v299 = vunpack.c.l.b16 %v284
  %v300 = vunpack.c.l.b16 %v285
  %v301 = vpack.c.b16 %v298, %v297
  %v302 = vpack.c.b16 %v300, %v299
  %vm305 = vcmask 261120
  %v307 = vsel %vm305, %v278, 0
  %v310 = vsel %vm305, %v279, 0
  %v313 = vsel %vm305, %v280, 0
  %v316 = vsel %vm305, %v281, 0
  %318 = vmatprep.subr.bf16.mxu0 0
  %319 = vmatpush1.bf16.msra.mxu0 0
  %320 = vmatprep.subr.bf16.mxu0 0
  %321 = vmatpush1.bf16.msra.mxu0 0
  %322 = vmatprep.subr.bf16.mxu0 0
  %323 = vmatpush1.bf16.msra.mxu0 0
  %324 = vmatprep.subr.bf16.mxu0 0
  %325 = vmatpush1.bf16.msra.mxu0 0
  %326 = vmatprep.subr.bf16.mxu0 0
  %327 = vmatpush1.bf16.msra.mxu0 0
  %328 = vmatprep.subr.bf16.mxu0 0
  %329 = vmatpush1.bf16.msra.mxu0 0
  %330 = vmatprep.subr.bf16.mxu0 0
  %331 = vmatpush1.bf16.msra.mxu0 %v302
  %332 = vmatprep.subr.bf16.mxu0 0
  %333 = vmatpush1.bf16.msra.mxu0 %v301
  %334 = vmatprep.subr.bf16.mxu0 0
  %335 = vmatpush2.bf16.msra.mxu0 0
  %336 = vmatprep.subr.bf16.mxu0 0
  %337 = vmatpush2.bf16.msra.mxu0 0
  %338 = vmatprep.subr.bf16.mxu0 0
  %339 = vmatpush2.bf16.msra.mxu0 0
  %340 = vmatprep.subr.bf16.mxu0 0
  %341 = vmatpush2.bf16.msra.mxu0 0
  %342 = vmatprep.subr.bf16.mxu0 0
  %343 = vmatpush2.bf16.msra.mxu0 0
  %344 = vmatprep.subr.bf16.mxu0 0
  %345 = vmatpush2.bf16.msra.mxu0 0
  %346 = vmatprep.subr.bf16.mxu0 0
  %347 = vmatpush2.bf16.msra.mxu0 0
  %348 = vmatprep.subr.bf16.mxu0 0
  %349 = vmatpush2.bf16.msra.mxu0 0
  %350 = vmatprep.mubr.bf16.mxu0 0
  %351 = vmatmul.mubr.bf16.gmra.mxu0 %v307
  %v352 = vpop.f32.mrf.mxu0
  %v353 = vadd.f32 %v291, %v352
  %v354 = vpop.f32.mrf.mxu0
  %v355 = vpop.f32.mrf.mxu0
  %v356 = vadd.f32 %v291, %v355
  %v357 = vpop.f32.mrf.mxu0
  %358 = vmatprep.mubr.bf16.mxu0 0
  %359 = vmatmul.mubr.bf16.gmra.mxu0 %v310
  %v360 = vpop.f32.mrf.mxu0
  %v361 = vadd.f32 %v291, %v360
  %v362 = vpop.f32.mrf.mxu0
  %v363 = vpop.f32.mrf.mxu0
  %v364 = vadd.f32 %v291, %v363
  %v365 = vpop.f32.mrf.mxu0
  %366 = vmatprep.mubr.bf16.mxu0 0
  %367 = vmatmul.mubr.bf16.gmra.mxu0 %v313
  %v368 = vpop.f32.mrf.mxu0
  %v369 = vadd.f32 %v291, %v368
  %v370 = vpop.f32.mrf.mxu0
  %v371 = vpop.f32.mrf.mxu0
  %v372 = vadd.f32 %v291, %v371
  %v373 = vpop.f32.mrf.mxu0
  %374 = vmatprep.mubr.bf16.mxu0 0
  %375 = vmatmul.mubr.bf16.gmra.mxu0 %v316
  %v376 = vpop.f32.mrf.mxu0
  %v377 = vadd.f32 %v291, %v376
  %v378 = vpop.f32.mrf.mxu0
  %v379 = vpop.f32.mrf.mxu0
  %v380 = vadd.f32 %v291, %v379
  %v381 = vpop.f32.mrf.mxu0
  %382 = vdwg.mxu0
  %v383 = vxor.u32 %v353, 2147483648
  %v384 = vxor.u32 %v356, 2147483648
  %v385 = vxor.u32 %v361, 2147483648
  %v386 = vxor.u32 %v364, 2147483648
  %v387 = vxor.u32 %v369, 2147483648
  %v388 = vxor.u32 %v372, 2147483648
  %v389 = vxor.u32 %v377, 2147483648
  %v390 = vxor.u32 %v380, 2147483648
  %v391 = vmul.f32 %v383, 1.442695
  %v392 = vpow.pop %v391
  %v393 = vmul.f32 %v384, 1.442695
  %v394 = vpow.pop %v393
  %v395 = vmul.f32 %v385, 1.442695
  %v396 = vpow.pop %v395
  %v397 = vmul.f32 %v386, 1.442695
  %v398 = vpow.pop %v397
  %v399 = vmul.f32 %v387, 1.442695
  %v400 = vpow.pop %v399
  %v401 = vmul.f32 %v388, 1.442695
  %v402 = vpow.pop %v401
  %v403 = vmul.f32 %v389, 1.442695
  %v404 = vpow.pop %v403
  %v405 = vmul.f32 %v390, 1.442695
  %v406 = vpow.pop %v405
  %v407 = vadd.f32 %v392, 1.0
  %v408 = vadd.f32 %v394, 1.0
  %v409 = vadd.f32 %v396, 1.0
  %v410 = vadd.f32 %v398, 1.0
  %v411 = vadd.f32 %v400, 1.0
  %v412 = vadd.f32 %v402, 1.0
  %v413 = vadd.f32 %v404, 1.0
  %v414 = vadd.f32 %v406, 1.0
  %v415 = vrcp.pop %v407
  %v416 = vmul.f32 1.0, %v415
  %v417 = vrcp.pop %v408
  %v418 = vmul.f32 1.0, %v417
  %v419 = vrcp.pop %v409
  %v420 = vmul.f32 1.0, %v419
  %v421 = vrcp.pop %v410
  %v422 = vmul.f32 1.0, %v421
  %v423 = vrcp.pop %v411
  %v424 = vmul.f32 1.0, %v423
  %v425 = vrcp.pop %v412
  %v426 = vmul.f32 1.0, %v425
  %v427 = vrcp.pop %v413
  %v428 = vmul.f32 1.0, %v427
  %v429 = vrcp.pop %v414
  %v430 = vmul.f32 1.0, %v429
  %v431 = vlaneseq
  %v432 = vshrl.u32 %v431, 7
  %v433 = vadd.s32 %v432, 8
  %v434 = vadd.s32 %v432, 16
  %v435 = vadd.s32 %v432, 24
  %v436 = vadd.s32 %v432, 32
  %v437 = vadd.s32 %v432, 40
  %v438 = vadd.s32 %v432, 48
  %v439 = vadd.s32 %v432, 56
  %s440 = smul.u32 0, 64
  %v441 = vstv %s440
  %v442 = vadd.s32 %v432, %v441
  %v443 = vadd.s32 %v433, %v441
  %v444 = vadd.s32 %v434, %v441
  %v445 = vadd.s32 %v435, %v441
  %v446 = vadd.s32 %v436, %v441
  %v447 = vadd.s32 %v437, %v441
  %v448 = vadd.s32 %v438, %v441
  %v449 = vadd.s32 %v439, %v441
  %v450 = vcvt.s32.f32 %v442
  %v451 = vcvt.s32.f32 %v443
  %v452 = vcvt.s32.f32 %v444
  %v453 = vcvt.s32.f32 %v445
  %v454 = vcvt.s32.f32 %v446
  %v455 = vcvt.s32.f32 %v447
  %v456 = vcvt.s32.f32 %v448
  %v457 = vcvt.s32.f32 %v449
  %v458 = vrcp.pop 8.0
  %v459 = vmul.f32 %v450, %v458
  %v460 = vmul.f32 %v451, %v458
  %v461 = vmul.f32 %v452, %v458
  %v462 = vmul.f32 %v453, %v458
  %v463 = vmul.f32 %v454, %v458
  %v464 = vmul.f32 %v455, %v458
  %v465 = vmul.f32 %v456, %v458
  %v466 = vmul.f32 %v457, %v458
  %v467 = vfloor.f32 %v459
  %v468 = vfloor.f32 %v460
  %v469 = vfloor.f32 %v461
  %v470 = vfloor.f32 %v462
  %v471 = vfloor.f32 %v463
  %v472 = vfloor.f32 %v464
  %v473 = vfloor.f32 %v465
  %v474 = vfloor.f32 %v466
  %v475 = vmul.f32 %v467, 8.0
  %v476 = vmul.f32 %v468, 8.0
  %v477 = vmul.f32 %v469, 8.0
  %v478 = vmul.f32 %v470, 8.0
  %v479 = vmul.f32 %v471, 8.0
  %v480 = vmul.f32 %v472, 8.0
  %v481 = vmul.f32 %v473, 8.0
  %v482 = vmul.f32 %v474, 8.0
  %v483 = vsub.f32 %v450, %v475
  %v484 = vsub.f32 %v451, %v476
  %v485 = vsub.f32 %v452, %v477
  %v486 = vsub.f32 %v453, %v478
  %v487 = vsub.f32 %v454, %v479
  %v488 = vsub.f32 %v455, %v480
  %v489 = vsub.f32 %v456, %v481
  %v490 = vsub.f32 %v457, %v482
  %v491 = vmul.f32 %v467, %v458
  %v492 = vmul.f32 %v468, %v458
  %v493 = vmul.f32 %v469, %v458
  %v494 = vmul.f32 %v470, %v458
  %v495 = vmul.f32 %v471, %v458
  %v496 = vmul.f32 %v472, %v458
  %v497 = vmul.f32 %v473, %v458
  %v498 = vmul.f32 %v474, %v458
  %v499 = vfloor.f32 %v491
  %v500 = vfloor.f32 %v492
  %v501 = vfloor.f32 %v493
  %v502 = vfloor.f32 %v494
  %v503 = vfloor.f32 %v495
  %v504 = vfloor.f32 %v496
  %v505 = vfloor.f32 %v497
  %v506 = vfloor.f32 %v498
  %v507 = vmul.f32 %v499, 8.0
  %v508 = vmul.f32 %v500, 8.0
  %v509 = vmul.f32 %v501, 8.0
  %v510 = vmul.f32 %v502, 8.0
  %v511 = vmul.f32 %v503, 8.0
  %v512 = vmul.f32 %v504, 8.0
  %v513 = vmul.f32 %v505, 8.0
  %v514 = vmul.f32 %v506, 8.0
  %v515 = vsub.f32 %v467, %v507
  %v516 = vsub.f32 %v468, %v508
  %v517 = vsub.f32 %v469, %v509
  %v518 = vsub.f32 %v470, %v510
  %v519 = vsub.f32 %v471, %v511
  %v520 = vsub.f32 %v472, %v512
  %v521 = vsub.f32 %v473, %v513
  %v522 = vsub.f32 %v474, %v514
  %vm523 = vcmp.lt.s32.totalorder %v442, 64
  %vm524 = vcmp.lt.s32.totalorder %v443, 64
  %vm525 = vcmp.lt.s32.totalorder %v444, 64
  %vm526 = vcmp.lt.s32.totalorder %v445, 64
  %vm527 = vcmp.lt.s32.totalorder %v446, 64
  %vm528 = vcmp.lt.s32.totalorder %v447, 64
  %vm529 = vcmp.lt.s32.totalorder %v448, 64
  %vm530 = vcmp.lt.s32.totalorder %v449, 64
  %v531 = vmul.f32 %v416, 2.0
  %v532 = vmul.f32 %v418, 2.0
  %v533 = vmul.f32 %v420, 2.0
  %v534 = vmul.f32 %v422, 2.0
  %v535 = vmul.f32 %v424, 2.0
  %v536 = vmul.f32 %v426, 2.0
  %v537 = vmul.f32 %v428, 2.0
  %v538 = vmul.f32 %v430, 2.0
  %v539 = vsub.f32 %v531, 0.5
  %v540 = vsub.f32 %v532, 0.5
  %v541 = vsub.f32 %v533, 0.5
  %v542 = vsub.f32 %v534, 0.5
  %v543 = vsub.f32 %v535, 0.5
  %v544 = vsub.f32 %v536, 0.5
  %v545 = vsub.f32 %v537, 0.5
  %v546 = vsub.f32 %v538, 0.5
  %v547 = vadd.f32 %v539, %v483
  %v548 = vadd.f32 %v540, %v484
  %v549 = vadd.f32 %v541, %v485
  %v550 = vadd.f32 %v542, %v486
  %v551 = vadd.f32 %v543, %v487
  %v552 = vadd.f32 %v544, %v488
  %v553 = vadd.f32 %v545, %v489
  %v554 = vadd.f32 %v546, %v490
  %v555 = vmul.f32 %v547, 4.0
  %v556 = vmul.f32 %v548, 4.0
  %v557 = vmul.f32 %v549, 4.0
  %v558 = vmul.f32 %v550, 4.0
  %v559 = vmul.f32 %v551, 4.0
  %v560 = vmul.f32 %v552, 4.0
  %v561 = vmul.f32 %v553, 4.0
  %v562 = vmul.f32 %v554, 4.0
  %v563 = vadd.f32 %v539, %v515
  %v564 = vadd.f32 %v540, %v516
  %v565 = vadd.f32 %v541, %v517
  %v566 = vadd.f32 %v542, %v518
  %v567 = vadd.f32 %v543, %v519
  %v568 = vadd.f32 %v544, %v520
  %v569 = vadd.f32 %v545, %v521
  %v570 = vadd.f32 %v546, %v522
  %v571 = vmul.f32 %v563, 4.0
  %v572 = vmul.f32 %v564, 4.0
  %v573 = vmul.f32 %v565, 4.0
  %v574 = vmul.f32 %v566, 4.0
  %v575 = vmul.f32 %v567, 4.0
  %v576 = vmul.f32 %v568, 4.0
  %v577 = vmul.f32 %v569, 4.0
  %v578 = vmul.f32 %v570, 4.0
  %v579 = vmul.f32 %v531, %v531
  %v580 = vmul.f32 %v532, %v532
  %v581 = vmul.f32 %v533, %v533
  %v582 = vmul.f32 %v534, %v534
  %v583 = vmul.f32 %v535, %v535
  %v584 = vmul.f32 %v536, %v536
  %v585 = vmul.f32 %v537, %v537
  %v586 = vmul.f32 %v538, %v538
  %v587 = vmul.f32 %v579, 10.0
  %v588 = vmul.f32 %v580, 10.0
  %v589 = vmul.f32 %v581, 10.0
  %v590 = vmul.f32 %v582, 10.0
  %v591 = vmul.f32 %v583, 10.0
  %v592 = vmul.f32 %v584, 10.0
  %v593 = vmul.f32 %v585, 10.0
  %v594 = vmul.f32 %v586, 10.0
  %v595 = vmul.f32 %v579, 13.0
  %v596 = vmul.f32 %v580, 13.0
  %v597 = vmul.f32 %v581, 13.0
  %v598 = vmul.f32 %v582, 13.0
  %v599 = vmul.f32 %v583, 13.0
  %v600 = vmul.f32 %v584, 13.0
  %v601 = vmul.f32 %v585, 13.0
  %v602 = vmul.f32 %v586, 13.0
  %611 = vrot.lane.b32.xlu0 %v416, 127
  %v612 = vpop.permute.xlu0 %611
  %613 = vrot.lane.b32.xlu0 %v418, 127
  %v614 = vpop.permute.xlu0 %613
  %615 = vrot.lane.b32.xlu0 %v420, 127
  %v616 = vpop.permute.xlu0 %615
  %617 = vrot.lane.b32.xlu0 %v422, 127
  %v618 = vpop.permute.xlu0 %617
  %619 = vrot.lane.b32.xlu0 %v424, 127
  %v620 = vpop.permute.xlu0 %619
  %621 = vrot.lane.b32.xlu0 %v426, 127
  %v622 = vpop.permute.xlu0 %621
  %623 = vrot.lane.b32.xlu0 %v428, 127
  %v624 = vpop.permute.xlu0 %623
  %625 = vrot.lane.b32.xlu0 %v430, 127
  %v626 = vpop.permute.xlu0 %625
  %v635 = vmul.f32 %v416, %v612
  %v636 = vmul.f32 %v418, %v614
  %v637 = vmul.f32 %v420, %v616
  %v638 = vmul.f32 %v422, %v618
  %v639 = vmul.f32 %v424, %v620
  %v640 = vmul.f32 %v426, %v622
  %v641 = vmul.f32 %v428, %v624
  %v642 = vmul.f32 %v430, %v626
  %v643 = vsel %vm523, %v635, -1.0
  %v644 = vsel %vm524, %v636, -1.0
  %v645 = vsel %vm525, %v637, -1.0
  %v646 = vsel %vm526, %v638, -1.0
  %v647 = vsel %vm527, %v639, -1.0
  %v648 = vsel %vm528, %v640, -1.0
  %v649 = vsel %vm529, %v641, -1.0
  %v650 = vsel %vm530, %v642, -1.0
  %v651 = vmul.f32 %v587, 0.5
  %v652 = vmul.f32 %v588, 0.5
  %v653 = vmul.f32 %v589, 0.5
  %v654 = vmul.f32 %v590, 0.5
  %v655 = vmul.f32 %v591, 0.5
  %v656 = vmul.f32 %v592, 0.5
  %v657 = vmul.f32 %v593, 0.5
  %v658 = vmul.f32 %v594, 0.5
  %667 = vrot.lane.b32.xlu0 %v651, 126
  %v668 = vpop.permute.xlu0 %667
  %669 = vrot.lane.b32.xlu0 %v652, 126
  %v670 = vpop.permute.xlu0 %669
  %671 = vrot.lane.b32.xlu0 %v653, 126
  %v672 = vpop.permute.xlu0 %671
  %673 = vrot.lane.b32.xlu0 %v654, 126
  %v674 = vpop.permute.xlu0 %673
  %675 = vrot.lane.b32.xlu0 %v655, 126
  %v676 = vpop.permute.xlu0 %675
  %677 = vrot.lane.b32.xlu0 %v656, 126
  %v678 = vpop.permute.xlu0 %677
  %679 = vrot.lane.b32.xlu0 %v657, 126
  %v680 = vpop.permute.xlu0 %679
  %681 = vrot.lane.b32.xlu0 %v658, 126
  %v682 = vpop.permute.xlu0 %681
  %v691 = vsub.f32 %v555, %v668
  %v692 = vsub.f32 %v556, %v670
  %v693 = vsub.f32 %v557, %v672
  %v694 = vsub.f32 %v558, %v674
  %v695 = vsub.f32 %v559, %v676
  %v696 = vsub.f32 %v560, %v678
  %v697 = vsub.f32 %v561, %v680
  %v698 = vsub.f32 %v562, %v682
  %v699 = vmul.f32 %v595, 0.5
  %v700 = vmul.f32 %v596, 0.5
  %v701 = vmul.f32 %v597, 0.5
  %v702 = vmul.f32 %v598, 0.5
  %v703 = vmul.f32 %v599, 0.5
  %v704 = vmul.f32 %v600, 0.5
  %v705 = vmul.f32 %v601, 0.5
  %v706 = vmul.f32 %v602, 0.5
  %715 = vrot.lane.b32.xlu0 %v699, 126
  %v716 = vpop.permute.xlu0 %715
  %717 = vrot.lane.b32.xlu0 %v700, 126
  %v718 = vpop.permute.xlu0 %717
  %719 = vrot.lane.b32.xlu0 %v701, 126
  %v720 = vpop.permute.xlu0 %719
  %721 = vrot.lane.b32.xlu0 %v702, 126
  %v722 = vpop.permute.xlu0 %721
  %723 = vrot.lane.b32.xlu0 %v703, 126
  %v724 = vpop.permute.xlu0 %723
  %725 = vrot.lane.b32.xlu0 %v704, 126
  %v726 = vpop.permute.xlu0 %725
  %727 = vrot.lane.b32.xlu0 %v705, 126
  %v728 = vpop.permute.xlu0 %727
  %729 = vrot.lane.b32.xlu0 %v706, 126
  %v730 = vpop.permute.xlu0 %729
  %v739 = vsub.f32 %v571, %v716
  %v740 = vsub.f32 %v572, %v718
  %v741 = vsub.f32 %v573, %v720
  %v742 = vsub.f32 %v574, %v722
  %v743 = vsub.f32 %v575, %v724
  %v744 = vsub.f32 %v576, %v726
  %v745 = vsub.f32 %v577, %v728
  %v746 = vsub.f32 %v578, %v730
  %v747 = vadd.f32 %v555, %v668
  %v748 = vadd.f32 %v556, %v670
  %v749 = vadd.f32 %v557, %v672
  %v750 = vadd.f32 %v558, %v674
  %v751 = vadd.f32 %v559, %v676
  %v752 = vadd.f32 %v560, %v678
  %v753 = vadd.f32 %v561, %v680
  %v754 = vadd.f32 %v562, %v682
  %v755 = vadd.f32 %v571, %v716
  %v756 = vadd.f32 %v572, %v718
  %v757 = vadd.f32 %v573, %v720
  %v758 = vadd.f32 %v574, %v722
  %v759 = vadd.f32 %v575, %v724
  %v760 = vadd.f32 %v576, %v726
  %v761 = vadd.f32 %v577, %v728
  %v762 = vadd.f32 %v578, %v730
  %771 = vrot.lane.b32.xlu0 %v747, 2
  %v772 = vpop.permute.xlu0 %771
  %773 = vrot.lane.b32.xlu0 %v748, 2
  %v774 = vpop.permute.xlu0 %773
  %775 = vrot.lane.b32.xlu0 %v749, 2
  %v776 = vpop.permute.xlu0 %775
  %777 = vrot.lane.b32.xlu0 %v750, 2
  %v778 = vpop.permute.xlu0 %777
  %779 = vrot.lane.b32.xlu0 %v751, 2
  %v780 = vpop.permute.xlu0 %779
  %781 = vrot.lane.b32.xlu0 %v752, 2
  %v782 = vpop.permute.xlu0 %781
  %783 = vrot.lane.b32.xlu0 %v753, 2
  %v784 = vpop.permute.xlu0 %783
  %785 = vrot.lane.b32.xlu0 %v754, 2
  %v786 = vpop.permute.xlu0 %785
  %803 = vrot.lane.b32.xlu0 %v755, 2
  %v804 = vpop.permute.xlu0 %803
  %805 = vrot.lane.b32.xlu0 %v756, 2
  %v806 = vpop.permute.xlu0 %805
  %807 = vrot.lane.b32.xlu0 %v757, 2
  %v808 = vpop.permute.xlu0 %807
  %809 = vrot.lane.b32.xlu0 %v758, 2
  %v810 = vpop.permute.xlu0 %809
  %811 = vrot.lane.b32.xlu0 %v759, 2
  %v812 = vpop.permute.xlu0 %811
  %813 = vrot.lane.b32.xlu0 %v760, 2
  %v814 = vpop.permute.xlu0 %813
  %815 = vrot.lane.b32.xlu0 %v761, 2
  %v816 = vpop.permute.xlu0 %815
  %817 = vrot.lane.b32.xlu0 %v762, 2
  %v818 = vpop.permute.xlu0 %817
  %vm827 = vcmask 7168
  %v828 = vsel %vm827, %v691, %v739
  %v829 = vsel %vm827, %v692, %v740
  %v830 = vsel %vm827, %v693, %v741
  %v831 = vsel %vm827, %v694, %v742
  %v832 = vsel %vm827, %v695, %v743
  %v833 = vsel %vm827, %v696, %v744
  %v834 = vsel %vm827, %v697, %v745
  %v835 = vsel %vm827, %v698, %v746
  %vm836 = vcmask 15360
  %v837 = vsel %vm836, %v828, %v772
  %v838 = vsel %vm836, %v829, %v774
  %v839 = vsel %vm836, %v830, %v776
  %v840 = vsel %vm836, %v831, %v778
  %v841 = vsel %vm836, %v832, %v780
  %v842 = vsel %vm836, %v833, %v782
  %v843 = vsel %vm836, %v834, %v784
  %v844 = vsel %vm836, %v835, %v786
  %vm845 = vcmask 23552
  %v846 = vsel %vm845, %v837, %v804
  %v847 = vsel %vm845, %v838, %v806
  %v848 = vsel %vm845, %v839, %v808
  %v849 = vsel %vm845, %v840, %v810
  %v850 = vsel %vm845, %v841, %v812
  %v851 = vsel %vm845, %v842, %v814
  %v852 = vsel %vm845, %v843, %v816
  %v853 = vsel %vm845, %v844, %v818
  %vm854 = vcmask 31744
  %v855 = vsel %vm854, %v846, %v643
  %v856 = vsel %vm854, %v847, %v644
  %v857 = vsel %vm854, %v848, %v645
  %v858 = vsel %vm854, %v849, %v646
  %v859 = vsel %vm854, %v850, %v647
  %v860 = vsel %vm854, %v851, %v648
  %v861 = vsel %vm854, %v852, %v649
  %v862 = vsel %vm854, %v853, %v650
  %vm863 = vcmask 39936
  %v864 = vsel %vm863, %v855, 0.0
  %v865 = vsel %vm863, %v856, 0.0
  %v866 = vsel %vm863, %v857, 0.0
  %v867 = vsel %vm863, %v858, 0.0
  %v868 = vsel %vm863, %v859, 0.0
  %v869 = vsel %vm863, %v860, 0.0
  %v870 = vsel %vm863, %v861, 0.0
  %v871 = vsel %vm863, %v862, 0.0
  %v872 = vmul.f32 %v579, 16.0
  %v873 = vmul.f32 %v580, 16.0
  %v874 = vmul.f32 %v581, 16.0
  %v875 = vmul.f32 %v582, 16.0
  %v876 = vmul.f32 %v583, 16.0
  %v877 = vmul.f32 %v584, 16.0
  %v878 = vmul.f32 %v585, 16.0
  %v879 = vmul.f32 %v586, 16.0
  %v880 = vmul.f32 %v579, 30.0
  %v881 = vmul.f32 %v580, 30.0
  %v882 = vmul.f32 %v581, 30.0
  %v883 = vmul.f32 %v582, 30.0
  %v884 = vmul.f32 %v583, 30.0
  %v885 = vmul.f32 %v584, 30.0
  %v886 = vmul.f32 %v585, 30.0
  %v887 = vmul.f32 %v586, 30.0
  %v888 = vmul.f32 %v872, 0.5
  %v889 = vmul.f32 %v873, 0.5
  %v890 = vmul.f32 %v874, 0.5
  %v891 = vmul.f32 %v875, 0.5
  %v892 = vmul.f32 %v876, 0.5
  %v893 = vmul.f32 %v877, 0.5
  %v894 = vmul.f32 %v878, 0.5
  %v895 = vmul.f32 %v879, 0.5
  %904 = vrot.lane.b32.xlu0 %v888, 126
  %v905 = vpop.permute.xlu0 %904
  %906 = vrot.lane.b32.xlu0 %v889, 126
  %v907 = vpop.permute.xlu0 %906
  %908 = vrot.lane.b32.xlu0 %v890, 126
  %v909 = vpop.permute.xlu0 %908
  %910 = vrot.lane.b32.xlu0 %v891, 126
  %v911 = vpop.permute.xlu0 %910
  %912 = vrot.lane.b32.xlu0 %v892, 126
  %v913 = vpop.permute.xlu0 %912
  %914 = vrot.lane.b32.xlu0 %v893, 126
  %v915 = vpop.permute.xlu0 %914
  %916 = vrot.lane.b32.xlu0 %v894, 126
  %v917 = vpop.permute.xlu0 %916
  %918 = vrot.lane.b32.xlu0 %v895, 126
  %v919 = vpop.permute.xlu0 %918
  %v928 = vsub.f32 %v555, %v905
  %v929 = vsub.f32 %v556, %v907
  %v930 = vsub.f32 %v557, %v909
  %v931 = vsub.f32 %v558, %v911
  %v932 = vsub.f32 %v559, %v913
  %v933 = vsub.f32 %v560, %v915
  %v934 = vsub.f32 %v561, %v917
  %v935 = vsub.f32 %v562, %v919
  %v936 = vmul.f32 %v880, 0.5
  %v937 = vmul.f32 %v881, 0.5
  %v938 = vmul.f32 %v882, 0.5
  %v939 = vmul.f32 %v883, 0.5
  %v940 = vmul.f32 %v884, 0.5
  %v941 = vmul.f32 %v885, 0.5
  %v942 = vmul.f32 %v886, 0.5
  %v943 = vmul.f32 %v887, 0.5
  %952 = vrot.lane.b32.xlu0 %v936, 126
  %v953 = vpop.permute.xlu0 %952
  %954 = vrot.lane.b32.xlu0 %v937, 126
  %v955 = vpop.permute.xlu0 %954
  %956 = vrot.lane.b32.xlu0 %v938, 126
  %v957 = vpop.permute.xlu0 %956
  %958 = vrot.lane.b32.xlu0 %v939, 126
  %v959 = vpop.permute.xlu0 %958
  %960 = vrot.lane.b32.xlu0 %v940, 126
  %v961 = vpop.permute.xlu0 %960
  %962 = vrot.lane.b32.xlu0 %v941, 126
  %v963 = vpop.permute.xlu0 %962
  %964 = vrot.lane.b32.xlu0 %v942, 126
  %v965 = vpop.permute.xlu0 %964
  %966 = vrot.lane.b32.xlu0 %v943, 126
  %v967 = vpop.permute.xlu0 %966
  %v976 = vsub.f32 %v571, %v953
  %v977 = vsub.f32 %v572, %v955
  %v978 = vsub.f32 %v573, %v957
  %v979 = vsub.f32 %v574, %v959
  %v980 = vsub.f32 %v575, %v961
  %v981 = vsub.f32 %v576, %v963
  %v982 = vsub.f32 %v577, %v965
  %v983 = vsub.f32 %v578, %v967
  %v984 = vadd.f32 %v555, %v905
  %v985 = vadd.f32 %v556, %v907
  %v986 = vadd.f32 %v557, %v909
  %v987 = vadd.f32 %v558, %v911
  %v988 = vadd.f32 %v559, %v913
  %v989 = vadd.f32 %v560, %v915
  %v990 = vadd.f32 %v561, %v917
  %v991 = vadd.f32 %v562, %v919
  %v992 = vadd.f32 %v571, %v953
  %v993 = vadd.f32 %v572, %v955
  %v994 = vadd.f32 %v573, %v957
  %v995 = vadd.f32 %v574, %v959
  %v996 = vadd.f32 %v575, %v961
  %v997 = vadd.f32 %v576, %v963
  %v998 = vadd.f32 %v577, %v965
  %v999 = vadd.f32 %v578, %v967
  %1008 = vrot.lane.b32.xlu0 %v928, 122
  %v1009 = vpop.permute.xlu0 %1008
  %1010 = vrot.lane.b32.xlu0 %v929, 122
  %v1011 = vpop.permute.xlu0 %1010
  %1012 = vrot.lane.b32.xlu0 %v930, 122
  %v1013 = vpop.permute.xlu0 %1012
  %1014 = vrot.lane.b32.xlu0 %v931, 122
  %v1015 = vpop.permute.xlu0 %1014
  %1016 = vrot.lane.b32.xlu0 %v932, 122
  %v1017 = vpop.permute.xlu0 %1016
  %1018 = vrot.lane.b32.xlu0 %v933, 122
  %v1019 = vpop.permute.xlu0 %1018
  %1020 = vrot.lane.b32.xlu0 %v934, 122
  %v1021 = vpop.permute.xlu0 %1020
  %1022 = vrot.lane.b32.xlu0 %v935, 122
  %v1023 = vpop.permute.xlu0 %1022
  %1040 = vrot.lane.b32.xlu0 %v976, 122
  %v1041 = vpop.permute.xlu0 %1040
  %1042 = vrot.lane.b32.xlu0 %v977, 122
  %v1043 = vpop.permute.xlu0 %1042
  %1044 = vrot.lane.b32.xlu0 %v978, 122
  %v1045 = vpop.permute.xlu0 %1044
  %1046 = vrot.lane.b32.xlu0 %v979, 122
  %v1047 = vpop.permute.xlu0 %1046
  %1048 = vrot.lane.b32.xlu0 %v980, 122
  %v1049 = vpop.permute.xlu0 %1048
  %1050 = vrot.lane.b32.xlu0 %v981, 122
  %v1051 = vpop.permute.xlu0 %1050
  %1052 = vrot.lane.b32.xlu0 %v982, 122
  %v1053 = vpop.permute.xlu0 %1052
  %1054 = vrot.lane.b32.xlu0 %v983, 122
  %v1055 = vpop.permute.xlu0 %1054
  %1072 = vrot.lane.b32.xlu0 %v984, 124
  %v1073 = vpop.permute.xlu0 %1072
  %1074 = vrot.lane.b32.xlu0 %v985, 124
  %v1075 = vpop.permute.xlu0 %1074
  %1076 = vrot.lane.b32.xlu0 %v986, 124
  %v1077 = vpop.permute.xlu0 %1076
  %1078 = vrot.lane.b32.xlu0 %v987, 124
  %v1079 = vpop.permute.xlu0 %1078
  %1080 = vrot.lane.b32.xlu0 %v988, 124
  %v1081 = vpop.permute.xlu0 %1080
  %1082 = vrot.lane.b32.xlu0 %v989, 124
  %v1083 = vpop.permute.xlu0 %1082
  %1084 = vrot.lane.b32.xlu0 %v990, 124
  %v1085 = vpop.permute.xlu0 %1084
  %1086 = vrot.lane.b32.xlu0 %v991, 124
  %v1087 = vpop.permute.xlu0 %1086
  %1104 = vrot.lane.b32.xlu0 %v992, 124
  %v1105 = vpop.permute.xlu0 %1104
  %1106 = vrot.lane.b32.xlu0 %v993, 124
  %v1107 = vpop.permute.xlu0 %1106
  %1108 = vrot.lane.b32.xlu0 %v994, 124
  %v1109 = vpop.permute.xlu0 %1108
  %1110 = vrot.lane.b32.xlu0 %v995, 124
  %v1111 = vpop.permute.xlu0 %1110
  %1112 = vrot.lane.b32.xlu0 %v996, 124
  %v1113 = vpop.permute.xlu0 %1112
  %1114 = vrot.lane.b32.xlu0 %v997, 124
  %v1115 = vpop.permute.xlu0 %1114
  %1116 = vrot.lane.b32.xlu0 %v998, 124
  %v1117 = vpop.permute.xlu0 %1116
  %1118 = vrot.lane.b32.xlu0 %v999, 124
  %v1119 = vpop.permute.xlu0 %1118
  %1136 = vrot.lane.b32.xlu0 %v643, 122
  %v1137 = vpop.permute.xlu0 %1136
  %1138 = vrot.lane.b32.xlu0 %v644, 122
  %v1139 = vpop.permute.xlu0 %1138
  %1140 = vrot.lane.b32.xlu0 %v645, 122
  %v1141 = vpop.permute.xlu0 %1140
  %1142 = vrot.lane.b32.xlu0 %v646, 122
  %v1143 = vpop.permute.xlu0 %1142
  %1144 = vrot.lane.b32.xlu0 %v647, 122
  %v1145 = vpop.permute.xlu0 %1144
  %1146 = vrot.lane.b32.xlu0 %v648, 122
  %v1147 = vpop.permute.xlu0 %1146
  %1148 = vrot.lane.b32.xlu0 %v649, 122
  %v1149 = vpop.permute.xlu0 %1148
  %1150 = vrot.lane.b32.xlu0 %v650, 122
  %v1151 = vpop.permute.xlu0 %1150
  %v1160 = vsel %vm827, %v1009, %v1041
  %v1161 = vsel %vm827, %v1011, %v1043
  %v1162 = vsel %vm827, %v1013, %v1045
  %v1163 = vsel %vm827, %v1015, %v1047
  %v1164 = vsel %vm827, %v1017, %v1049
  %v1165 = vsel %vm827, %v1019, %v1051
  %v1166 = vsel %vm827, %v1021, %v1053
  %v1167 = vsel %vm827, %v1023, %v1055
  %v1168 = vsel %vm836, %v1160, %v1073
  %v1169 = vsel %vm836, %v1161, %v1075
  %v1170 = vsel %vm836, %v1162, %v1077
  %v1171 = vsel %vm836, %v1163, %v1079
  %v1172 = vsel %vm836, %v1164, %v1081
  %v1173 = vsel %vm836, %v1165, %v1083
  %v1174 = vsel %vm836, %v1166, %v1085
  %v1175 = vsel %vm836, %v1167, %v1087
  %v1176 = vsel %vm845, %v1168, %v1105
  %v1177 = vsel %vm845, %v1169, %v1107
  %v1178 = vsel %vm845, %v1170, %v1109
  %v1179 = vsel %vm845, %v1171, %v1111
  %v1180 = vsel %vm845, %v1172, %v1113
  %v1181 = vsel %vm845, %v1173, %v1115
  %v1182 = vsel %vm845, %v1174, %v1117
  %v1183 = vsel %vm845, %v1175, %v1119
  %v1184 = vsel %vm854, %v1176, %v1137
  %v1185 = vsel %vm854, %v1177, %v1139
  %v1186 = vsel %vm854, %v1178, %v1141
  %v1187 = vsel %vm854, %v1179, %v1143
  %v1188 = vsel %vm854, %v1180, %v1145
  %v1189 = vsel %vm854, %v1181, %v1147
  %v1190 = vsel %vm854, %v1182, %v1149
  %v1191 = vsel %vm854, %v1183, %v1151
  %v1192 = vsel %vm863, %v1184, 0.0
  %v1193 = vsel %vm863, %v1185, 0.0
  %v1194 = vsel %vm863, %v1186, 0.0
  %v1195 = vsel %vm863, %v1187, 0.0
  %v1196 = vsel %vm863, %v1188, 0.0
  %v1197 = vsel %vm863, %v1189, 0.0
  %v1198 = vsel %vm863, %v1190, 0.0
  %v1199 = vsel %vm863, %v1191, 0.0
  %v1200 = vmul.f32 %v579, 33.0
  %v1201 = vmul.f32 %v580, 33.0
  %v1202 = vmul.f32 %v581, 33.0
  %v1203 = vmul.f32 %v582, 33.0
  %v1204 = vmul.f32 %v583, 33.0
  %v1205 = vmul.f32 %v584, 33.0
  %v1206 = vmul.f32 %v585, 33.0
  %v1207 = vmul.f32 %v586, 33.0
  %v1208 = vmul.f32 %v579, 23.0
  %v1209 = vmul.f32 %v580, 23.0
  %v1210 = vmul.f32 %v581, 23.0
  %v1211 = vmul.f32 %v582, 23.0
  %v1212 = vmul.f32 %v583, 23.0
  %v1213 = vmul.f32 %v584, 23.0
  %v1214 = vmul.f32 %v585, 23.0
  %v1215 = vmul.f32 %v586, 23.0
  %v1216 = vmul.f32 %v1200, 0.5
  %v1217 = vmul.f32 %v1201, 0.5
  %v1218 = vmul.f32 %v1202, 0.5
  %v1219 = vmul.f32 %v1203, 0.5
  %v1220 = vmul.f32 %v1204, 0.5
  %v1221 = vmul.f32 %v1205, 0.5
  %v1222 = vmul.f32 %v1206, 0.5
  %v1223 = vmul.f32 %v1207, 0.5
  %1232 = vrot.lane.b32.xlu0 %v1216, 126
  %v1233 = vpop.permute.xlu0 %1232
  %1234 = vrot.lane.b32.xlu0 %v1217, 126
  %v1235 = vpop.permute.xlu0 %1234
  %1236 = vrot.lane.b32.xlu0 %v1218, 126
  %v1237 = vpop.permute.xlu0 %1236
  %1238 = vrot.lane.b32.xlu0 %v1219, 126
  %v1239 = vpop.permute.xlu0 %1238
  %1240 = vrot.lane.b32.xlu0 %v1220, 126
  %v1241 = vpop.permute.xlu0 %1240
  %1242 = vrot.lane.b32.xlu0 %v1221, 126
  %v1243 = vpop.permute.xlu0 %1242
  %1244 = vrot.lane.b32.xlu0 %v1222, 126
  %v1245 = vpop.permute.xlu0 %1244
  %1246 = vrot.lane.b32.xlu0 %v1223, 126
  %v1247 = vpop.permute.xlu0 %1246
  %v1256 = vsub.f32 %v555, %v1233
  %v1257 = vsub.f32 %v556, %v1235
  %v1258 = vsub.f32 %v557, %v1237
  %v1259 = vsub.f32 %v558, %v1239
  %v1260 = vsub.f32 %v559, %v1241
  %v1261 = vsub.f32 %v560, %v1243
  %v1262 = vsub.f32 %v561, %v1245
  %v1263 = vsub.f32 %v562, %v1247
  %v1264 = vmul.f32 %v1208, 0.5
  %v1265 = vmul.f32 %v1209, 0.5
  %v1266 = vmul.f32 %v1210, 0.5
  %v1267 = vmul.f32 %v1211, 0.5
  %v1268 = vmul.f32 %v1212, 0.5
  %v1269 = vmul.f32 %v1213, 0.5
  %v1270 = vmul.f32 %v1214, 0.5
  %v1271 = vmul.f32 %v1215, 0.5
  %1280 = vrot.lane.b32.xlu0 %v1264, 126
  %v1281 = vpop.permute.xlu0 %1280
  %1282 = vrot.lane.b32.xlu0 %v1265, 126
  %v1283 = vpop.permute.xlu0 %1282
  %1284 = vrot.lane.b32.xlu0 %v1266, 126
  %v1285 = vpop.permute.xlu0 %1284
  %1286 = vrot.lane.b32.xlu0 %v1267, 126
  %v1287 = vpop.permute.xlu0 %1286
  %1288 = vrot.lane.b32.xlu0 %v1268, 126
  %v1289 = vpop.permute.xlu0 %1288
  %1290 = vrot.lane.b32.xlu0 %v1269, 126
  %v1291 = vpop.permute.xlu0 %1290
  %1292 = vrot.lane.b32.xlu0 %v1270, 126
  %v1293 = vpop.permute.xlu0 %1292
  %1294 = vrot.lane.b32.xlu0 %v1271, 126
  %v1295 = vpop.permute.xlu0 %1294
  %v1304 = vsub.f32 %v571, %v1281
  %v1305 = vsub.f32 %v572, %v1283
  %v1306 = vsub.f32 %v573, %v1285
  %v1307 = vsub.f32 %v574, %v1287
  %v1308 = vsub.f32 %v575, %v1289
  %v1309 = vsub.f32 %v576, %v1291
  %v1310 = vsub.f32 %v577, %v1293
  %v1311 = vsub.f32 %v578, %v1295
  %v1312 = vadd.f32 %v555, %v1233
  %v1313 = vadd.f32 %v556, %v1235
  %v1314 = vadd.f32 %v557, %v1237
  %v1315 = vadd.f32 %v558, %v1239
  %v1316 = vadd.f32 %v559, %v1241
  %v1317 = vadd.f32 %v560, %v1243
  %v1318 = vadd.f32 %v561, %v1245
  %v1319 = vadd.f32 %v562, %v1247
  %v1320 = vadd.f32 %v571, %v1281
  %v1321 = vadd.f32 %v572, %v1283
  %v1322 = vadd.f32 %v573, %v1285
  %v1323 = vadd.f32 %v574, %v1287
  %v1324 = vadd.f32 %v575, %v1289
  %v1325 = vadd.f32 %v576, %v1291
  %v1326 = vadd.f32 %v577, %v1293
  %v1327 = vadd.f32 %v578, %v1295
  %1336 = vrot.lane.b32.xlu0 %v1256, 116
  %v1337 = vpop.permute.xlu0 %1336
  %1338 = vrot.lane.b32.xlu0 %v1257, 116
  %v1339 = vpop.permute.xlu0 %1338
  %1340 = vrot.lane.b32.xlu0 %v1258, 116
  %v1341 = vpop.permute.xlu0 %1340
  %1342 = vrot.lane.b32.xlu0 %v1259, 116
  %v1343 = vpop.permute.xlu0 %1342
  %1344 = vrot.lane.b32.xlu0 %v1260, 116
  %v1345 = vpop.permute.xlu0 %1344
  %1346 = vrot.lane.b32.xlu0 %v1261, 116
  %v1347 = vpop.permute.xlu0 %1346
  %1348 = vrot.lane.b32.xlu0 %v1262, 116
  %v1349 = vpop.permute.xlu0 %1348
  %1350 = vrot.lane.b32.xlu0 %v1263, 116
  %v1351 = vpop.permute.xlu0 %1350
  %1368 = vrot.lane.b32.xlu0 %v1304, 116
  %v1369 = vpop.permute.xlu0 %1368
  %1370 = vrot.lane.b32.xlu0 %v1305, 116
  %v1371 = vpop.permute.xlu0 %1370
  %1372 = vrot.lane.b32.xlu0 %v1306, 116
  %v1373 = vpop.permute.xlu0 %1372
  %1374 = vrot.lane.b32.xlu0 %v1307, 116
  %v1375 = vpop.permute.xlu0 %1374
  %1376 = vrot.lane.b32.xlu0 %v1308, 116
  %v1377 = vpop.permute.xlu0 %1376
  %1378 = vrot.lane.b32.xlu0 %v1309, 116
  %v1379 = vpop.permute.xlu0 %1378
  %1380 = vrot.lane.b32.xlu0 %v1310, 116
  %v1381 = vpop.permute.xlu0 %1380
  %1382 = vrot.lane.b32.xlu0 %v1311, 116
  %v1383 = vpop.permute.xlu0 %1382
  %1400 = vrot.lane.b32.xlu0 %v1312, 118
  %v1401 = vpop.permute.xlu0 %1400
  %1402 = vrot.lane.b32.xlu0 %v1313, 118
  %v1403 = vpop.permute.xlu0 %1402
  %1404 = vrot.lane.b32.xlu0 %v1314, 118
  %v1405 = vpop.permute.xlu0 %1404
  %1406 = vrot.lane.b32.xlu0 %v1315, 118
  %v1407 = vpop.permute.xlu0 %1406
  %1408 = vrot.lane.b32.xlu0 %v1316, 118
  %v1409 = vpop.permute.xlu0 %1408
  %1410 = vrot.lane.b32.xlu0 %v1317, 118
  %v1411 = vpop.permute.xlu0 %1410
  %1412 = vrot.lane.b32.xlu0 %v1318, 118
  %v1413 = vpop.permute.xlu0 %1412
  %1414 = vrot.lane.b32.xlu0 %v1319, 118
  %v1415 = vpop.permute.xlu0 %1414
  %1432 = vrot.lane.b32.xlu0 %v1320, 118
  %v1433 = vpop.permute.xlu0 %1432
  %1434 = vrot.lane.b32.xlu0 %v1321, 118
  %v1435 = vpop.permute.xlu0 %1434
  %1436 = vrot.lane.b32.xlu0 %v1322, 118
  %v1437 = vpop.permute.xlu0 %1436
  %1438 = vrot.lane.b32.xlu0 %v1323, 118
  %v1439 = vpop.permute.xlu0 %1438
  %1440 = vrot.lane.b32.xlu0 %v1324, 118
  %v1441 = vpop.permute.xlu0 %1440
  %1442 = vrot.lane.b32.xlu0 %v1325, 118
  %v1443 = vpop.permute.xlu0 %1442
  %1444 = vrot.lane.b32.xlu0 %v1326, 118
  %v1445 = vpop.permute.xlu0 %1444
  %1446 = vrot.lane.b32.xlu0 %v1327, 118
  %v1447 = vpop.permute.xlu0 %1446
  %1456 = vrot.lane.b32.xlu0 %v643, 116
  %v1457 = vpop.permute.xlu0 %1456
  %1458 = vrot.lane.b32.xlu0 %v644, 116
  %v1459 = vpop.permute.xlu0 %1458
  %1460 = vrot.lane.b32.xlu0 %v645, 116
  %v1461 = vpop.permute.xlu0 %1460
  %1462 = vrot.lane.b32.xlu0 %v646, 116
  %v1463 = vpop.permute.xlu0 %1462
  %1464 = vrot.lane.b32.xlu0 %v647, 116
  %v1465 = vpop.permute.xlu0 %1464
  %1466 = vrot.lane.b32.xlu0 %v648, 116
  %v1467 = vpop.permute.xlu0 %1466
  %1468 = vrot.lane.b32.xlu0 %v649, 116
  %v1469 = vpop.permute.xlu0 %1468
  %1470 = vrot.lane.b32.xlu0 %v650, 116
  %v1471 = vpop.permute.xlu0 %1470
  %v1480 = vsel %vm827, %v1337, %v1369
  %v1481 = vsel %vm827, %v1339, %v1371
  %v1482 = vsel %vm827, %v1341, %v1373
  %v1483 = vsel %vm827, %v1343, %v1375
  %v1484 = vsel %vm827, %v1345, %v1377
  %v1485 = vsel %vm827, %v1347, %v1379
  %v1486 = vsel %vm827, %v1349, %v1381
  %v1487 = vsel %vm827, %v1351, %v1383
  %v1488 = vsel %vm836, %v1480, %v1401
  %v1489 = vsel %vm836, %v1481, %v1403
  %v1490 = vsel %vm836, %v1482, %v1405
  %v1491 = vsel %vm836, %v1483, %v1407
  %v1492 = vsel %vm836, %v1484, %v1409
  %v1493 = vsel %vm836, %v1485, %v1411
  %v1494 = vsel %vm836, %v1486, %v1413
  %v1495 = vsel %vm836, %v1487, %v1415
  %v1496 = vsel %vm845, %v1488, %v1433
  %v1497 = vsel %vm845, %v1489, %v1435
  %v1498 = vsel %vm845, %v1490, %v1437
  %v1499 = vsel %vm845, %v1491, %v1439
  %v1500 = vsel %vm845, %v1492, %v1441
  %v1501 = vsel %vm845, %v1493, %v1443
  %v1502 = vsel %vm845, %v1494, %v1445
  %v1503 = vsel %vm845, %v1495, %v1447
  %v1504 = vsel %vm854, %v1496, %v1457
  %v1505 = vsel %vm854, %v1497, %v1459
  %v1506 = vsel %vm854, %v1498, %v1461
  %v1507 = vsel %vm854, %v1499, %v1463
  %v1508 = vsel %vm854, %v1500, %v1465
  %v1509 = vsel %vm854, %v1501, %v1467
  %v1510 = vsel %vm854, %v1502, %v1469
  %v1511 = vsel %vm854, %v1503, %v1471
  %v1512 = vsel %vm863, %v1504, 0.0
  %v1513 = vsel %vm863, %v1505, 0.0
  %v1514 = vsel %vm863, %v1506, 0.0
  %v1515 = vsel %vm863, %v1507, 0.0
  %v1516 = vsel %vm863, %v1508, 0.0
  %v1517 = vsel %vm863, %v1509, 0.0
  %v1518 = vsel %vm863, %v1510, 0.0
  %v1519 = vsel %vm863, %v1511, 0.0
  %1528 = vrot.lane.b32.xlu0 %v1192, 8
  %v1529 = vpop.permute.xlu0 %1528
  %1530 = vrot.lane.b32.xlu0 %v1193, 8
  %v1531 = vpop.permute.xlu0 %1530
  %1532 = vrot.lane.b32.xlu0 %v1194, 8
  %v1533 = vpop.permute.xlu0 %1532
  %1534 = vrot.lane.b32.xlu0 %v1195, 8
  %v1535 = vpop.permute.xlu0 %1534
  %1536 = vrot.lane.b32.xlu0 %v1196, 8
  %v1537 = vpop.permute.xlu0 %1536
  %1538 = vrot.lane.b32.xlu0 %v1197, 8
  %v1539 = vpop.permute.xlu0 %1538
  %1540 = vrot.lane.b32.xlu0 %v1198, 8
  %v1541 = vpop.permute.xlu0 %1540
  %1542 = vrot.lane.b32.xlu0 %v1199, 8
  %v1543 = vpop.permute.xlu0 %1542
  %1560 = vrot.lane.b32.xlu0 %v1512, 16
  %v1561 = vpop.permute.xlu0 %1560
  %1562 = vrot.lane.b32.xlu0 %v1513, 16
  %v1563 = vpop.permute.xlu0 %1562
  %1564 = vrot.lane.b32.xlu0 %v1514, 16
  %v1565 = vpop.permute.xlu0 %1564
  %1566 = vrot.lane.b32.xlu0 %v1515, 16
  %v1567 = vpop.permute.xlu0 %1566
  %1568 = vrot.lane.b32.xlu0 %v1516, 16
  %v1569 = vpop.permute.xlu0 %1568
  %1570 = vrot.lane.b32.xlu0 %v1517, 16
  %v1571 = vpop.permute.xlu0 %1570
  %1572 = vrot.lane.b32.xlu0 %v1518, 16
  %v1573 = vpop.permute.xlu0 %1572
  %1574 = vrot.lane.b32.xlu0 %v1519, 16
  %v1575 = vpop.permute.xlu0 %1574
  %vm1584 = vcmask 64512
  %v1585 = vsel %vm1584, %v864, %v1529
  %v1586 = vsel %vm1584, %v865, %v1531
  %v1587 = vsel %vm1584, %v866, %v1533
  %v1588 = vsel %vm1584, %v867, %v1535
  %v1589 = vsel %vm1584, %v868, %v1537
  %v1590 = vsel %vm1584, %v869, %v1539
  %v1591 = vsel %vm1584, %v870, %v1541
  %v1592 = vsel %vm1584, %v871, %v1543
  %v1593 = vsel %vm144, %v1585, %v1561
  %v1594 = vsel %vm144, %v1586, %v1563
  %v1595 = vsel %vm144, %v1587, %v1565
  %v1596 = vsel %vm144, %v1588, %v1567
  %v1597 = vsel %vm144, %v1589, %v1569
  %v1598 = vsel %vm144, %v1590, %v1571
  %v1599 = vsel %vm144, %v1591, %v1573
  %v1600 = vsel %vm144, %v1592, %v1575
  %vm1601 = vcmask 195584
  %v1602 = vsel %vm1601, %v1593, 0.0
  %v1603 = vsel %vm1601, %v1594, 0.0
  %v1604 = vsel %vm1601, %v1595, 0.0
  %v1605 = vsel %vm1601, %v1596, 0.0
  %v1606 = vsel %vm1601, %v1597, 0.0
  %v1607 = vsel %vm1601, %v1598, 0.0
  %v1608 = vsel %vm1601, %v1599, 0.0
  %v1609 = vsel %vm1601, %v1600, 0.0
  %1610 = vst [vmem:[%s5] sm:$0xff] %v1602
  %1611 = vst [vmem:[%s5 + $0x8] sm:$0xff] %v1603
  %1612 = vst [vmem:[%s5 + $0x10] sm:$0xff] %v1604
  %1613 = vst [vmem:[%s5 + $0x18] sm:$0xff] %v1605
  %1614 = vst [vmem:[%s5 + $0x20] sm:$0xff] %v1606
  %1615 = vst [vmem:[%s5 + $0x28] sm:$0xff] %v1607
  %1616 = vst [vmem:[%s5 + $0x30] sm:$0xff] %v1608
  %1617 = vst [vmem:[%s5 + $0x38] sm:$0xff] %v1609
  // Predicated region
  $region22: #{_detect.3} parent=0 // pred_check
    _
  $region23: #{_detect.3} parent=0 // pred_check_branch
    %1619 = sbr.rel (0) target = $region25
  $region24: #{_detect.3} parent=0 // pred_region
    _
  $region25: #{_detect.3} parent=0 // pred_fallthru
    _
  // Predicated region
  $region26: #{_detect.3} parent=0 // pred_check
    _
  $region27: #{_detect.3} parent=0 // pred_check_branch
    %1621 = sbr.rel (0) target = $region29
  $region28: #{_detect.3} parent=0 // pred_region
    _
  $region29: #{_detect.3} parent=0 // pred_fallthru
    _

</llo_original>
